<compile_context>
chip_gen: v7x
topology: tpu7x:2x2x1
jax: 0.10.0
libtpu: 0.0.40
codegen_flags: <defaults>
</compile_context>

<pallas_src>
import math
import functools

import jax
import jax.numpy as jnp
from jax.experimental import pallas as pl
from jax.experimental.pallas import tpu as pltpu

EPS = 1e-4  # eps in softmax_kernel


# ---------------------------------------------------------------------------
# Fused kernel.  Grid = (2, N // tile_n); phase axis first (sequential).
#   refs: z[tile_n, HD]                         (mxu dtype: bf16 by default)
#         W0[HD, 2HD+HM], b0[1, 2HD+HM]         (phase 0: [k | v | k_dash] projection)
#         W1[HD, HD+HM],  b1[1, HD+HM]          (phase 1: [q | q_dash] projection)
#         DM[HD, HM]  block-diag ones: (x*x)@DM * diag_scale = per-head diag term
#         MD[HM, HD]  block-diag ones: kvs cross-head mask + denominator broadcast
#   out:  [tile_n, HD]  (f32)
#   scratch: kvs_acc[HM, HD] f32, ksum_acc[1, HM] f32   (persist across the whole grid)
# ---------------------------------------------------------------------------
def _fused_kernel(z_ref, w0_ref, b0_ref, w1_ref, b1_ref, dm_ref, md_ref,
                  out_ref, kvs_acc, ksum_acc, *,
                  hd, num_heads, num_feat, diag_scale, eps):
    p = pl.program_id(0)
    i = pl.program_id(1)
    n_tiles = pl.num_programs(1)
    mdt = z_ref.dtype                      # MXU operand dtype (bf16 or f32)

    @pl.when(jnp.logical_and(p == 0, i == 0))
    def _init():
        kvs_acc[...] = jnp.zeros_like(kvs_acc)
        ksum_acc[...] = jnp.zeros_like(ksum_acc)

    z = z_ref[...]                                                     # [TN, HD]

    # ---------------- phase 0: key/value stage, accumulate kvs & ksum --------
    @pl.when(p == 0)
    def _kv_phase():
        kvd = jnp.dot(z, w0_ref[...],
                      preferred_element_type=jnp.float32) + b0_ref[...]    # [TN, 2HD+HM] f32
        k = kvd[:, :hd]                       # already scaled by 1/sqrt(tau)
        v = kvd[:, hd:2 * hd]
        k_dash = kvd[:, 2 * hd:]              # = k @ (dn * proj^T) per head (bias folded)
        k_diag = diag_scale * jnp.dot((k * k).astype(mdt), dm_ref[...],
                                      preferred_element_type=jnp.float32)  # [TN, HM]
        # key stabilizer: per-token max over (head, feature) == max over last axis
        k_max = jnp.max(k_dash, axis=-1, keepdims=True)                    # [TN, 1]
        kk = jnp.exp(k_dash - k_diag - k_max) + eps                        # [TN, HM] f32
        # kvs[h,m,d] accumulation as ONE wide matmul (cross-head blocks masked at phase end)
        # TODO(synk): inspect lowering for an explicit vxpose of kk; if present, restructure
        # so the transposed operand is the narrower v ([TN, HD]).
        kvs_acc[...] += jnp.einsum('nm,nd->md', kk.astype(mdt), v.astype(mdt),
                                   preferred_element_type=jnp.float32)     # [HM, HD]
        ksum_acc[...] += jnp.sum(kk, axis=0, keepdims=True)                # [1, HM]

    # Zero the cross-head blocks of kvs once, at the end of phase 0 (0/1 mask, exact).
    @pl.when(jnp.logical_and(p == 0, i == n_tiles - 1))
    def _mask():
        kvs_acc[...] = kvs_acc[...] * md_ref[...]

    # ---------------- phase 1: query stage, write output ---------------------
    @pl.when(p == 1)
    def _q_phase():
        q1 = jnp.dot(z, w1_ref[...],
                     preferred_element_type=jnp.float32) + b1_ref[...]     # [TN, HD+HM] f32
        q = q1[:, :hd]
        q_dash = q1[:, hd:]
        q_diag = diag_scale * jnp.dot((q * q).astype(mdt), dm_ref[...],
                                      preferred_element_type=jnp.float32)  # [TN, HM]
        # query stabilizer: per-(token, head) max over features, computed with full-width
        # masked max + select (no sub-128 lane slices, no concatenates).
        lane = jax.lax.broadcasted_iota(jnp.int32, q_dash.shape, 1)        # [TN, HM]
        q_max = jnp.zeros_like(q_dash)
        for h in range(num_heads):
            in_head = jnp.logical_and(lane >= h * num_feat, lane < (h + 1) * num_feat)
            m_h = jnp.max(jnp.where(in_head, q_dash, -jnp.inf), axis=-1, keepdims=True)
            q_max = jnp.where(in_head, m_h, q_max)
        qk = jnp.exp(q_dash - q_diag - q_max) + eps                        # [TN, HM] f32

        numerator = jnp.dot(qk.astype(mdt), kvs_acc[...].astype(mdt),
                            preferred_element_type=jnp.float32)            # [TN, HD]
        # denominator per (token, head), broadcast over D via block-diag ones matmul
        den = jnp.dot((qk * ksum_acc[...]).astype(mdt), md_ref[...],
                      preferred_element_type=jnp.float32)                   # [TN, HD]
        r = pl.reciprocal(den, approx=True)
        r = r * (2.0 - den * r)      # one Newton step -> ~f32 precision on the EUP path
        out_ref[...] = (numerator * r).astype(out_ref.dtype)


# ---------------------------------------------------------------------------
# Wrapper: host-side layout prep (fused block-diagonal weights, folded scales)
# + one pallas_call with phase/tile grid.
# ---------------------------------------------------------------------------
def kernel_attention_forward(z, tau, Wq, bq, Wk, bk, Wv, bv, proj, *,
                             tile_n=None, mxu_dtype=jnp.bfloat16):
    N, H, D = z.shape
    M = proj.shape[0]
    HD, HM = H * D, H * M

    if tile_n is None:
        tile_n = N if N <= 2048 else 2048
    assert N % tile_n == 0 and (tile_n % 8 == 0 or tile_n == N)

    ist = 1.0 / math.sqrt(tau)              # folded into Wq/bq/Wk/bk
    dn = float(D) ** (-0.25)                # data_normalizer (folded into P_blk)
    diag_scale = 0.5 * dn * dn              # applied as exact f32 scalar inside the kernel
    # NOTE: ratio = M**-0.5 cancels exactly in numerator/denominator (incl. eps) -> dropped.

    z_flat = z.reshape(N, HD)

    # Per-head PyTorch Linear (y = x @ W.T + b) -> block-diagonal flattened weights (f32).
    Wq_blk = jax.scipy.linalg.block_diag(*[Wq[h].T for h in range(H)]) * ist    # [HD, HD]
    Wk_blk = jax.scipy.linalg.block_diag(*[Wk[h].T for h in range(H)]) * ist
    Wv_blk = jax.scipy.linalg.block_diag(*[Wv[h].T for h in range(H)])
    bq_s = bq.reshape(1, HD) * ist
    bk_s = bk.reshape(1, HD) * ist
    bv_f = bv.reshape(1, HD)

    # Block-replicated random-feature projection (includes data_normalizer dn).
    P_blk = jax.scipy.linalg.block_diag(*([(dn * proj).T] * H))                  # [HD, HM]

    # Fused phase-0 weights: one z @ W0 + b0 gives [k | v | k_dash].
    W0 = jnp.concatenate([Wk_blk, Wv_blk, Wk_blk @ P_blk], axis=1)               # [HD, 2HD+HM]
    b0 = jnp.concatenate([bk_s, bv_f, bk_s @ P_blk], axis=1)                     # [1, 2HD+HM]
    # Fused phase-1 weights: one z @ W1 + b1 gives [q | q_dash].
    W1 = jnp.concatenate([Wq_blk, Wq_blk @ P_blk], axis=1)                       # [HD, HD+HM]
    b1 = jnp.concatenate([bq_s, bq_s @ P_blk], axis=1)                           # [1, HD+HM]

    # Block-diag ONES helpers (exactly representable in bf16):
    DM = jax.scipy.linalg.block_diag(*([jnp.ones((D, M), jnp.float32)] * H))     # [HD, HM]
    MD = jax.scipy.linalg.block_diag(*([jnp.ones((M, D), jnp.float32)] * H))     # [HM, HD]

    # MXU operands in mxu_dtype (bf16 by default); biases & accumulators stay f32.
    z_in = z_flat.astype(mxu_dtype)
    W0 = W0.astype(mxu_dtype)
    W1 = W1.astype(mxu_dtype)
    DM = DM.astype(mxu_dtype)
    MD = MD.astype(mxu_dtype)

    grid = (2, N // tile_n)
    full = lambda p, i: (0, 0)

    out = pl.pallas_call(
        functools.partial(_fused_kernel, hd=HD, num_heads=H, num_feat=M,
                          diag_scale=diag_scale, eps=EPS),
        out_shape=jax.ShapeDtypeStruct((N, HD), jnp.float32),
        grid=grid,
        in_specs=[
            pl.BlockSpec((tile_n, HD), lambda p, i: (i, 0)),     # z tile (both phases)
            pl.BlockSpec((HD, 2 * HD + HM), full),               # W0 (resident)
            pl.BlockSpec((1, 2 * HD + HM), full),                # b0
            pl.BlockSpec((HD, HD + HM), full),                   # W1
            pl.BlockSpec((1, HD + HM), full),                    # b1
            pl.BlockSpec((HD, HM), full),                        # DM
            pl.BlockSpec((HM, HD), full),                        # MD
        ],
        # phase 0 parks on output block 0 (never written; never flushed because the block
        # index does not change across the p=0 -> p=1,i=0 boundary); phase 1 writes block i
        # lane-dense, one writeback per block.
        out_specs=pl.BlockSpec((tile_n, HD), lambda p, i: (p * i, 0)),
        scratch_shapes=[pltpu.VMEM((HM, HD), jnp.float32),       # kvs accumulator
                        pltpu.VMEM((1, HM), jnp.float32)],       # ksum accumulator
        compiler_params=pltpu.CompilerParams(
            dimension_semantics=("arbitrary", "arbitrary")),
        # TODO(synk): v7x dual-TensorCore split of phase 1 / partial phase-0 accumulation.
    )(z_in, W0, b0, W1, b1, DM, MD)

    # z_next.flatten(-2, -1).squeeze()
    return jnp.squeeze(out)


# ---------------------------------------------------------------------------
# Parameter / projection-matrix setup (deterministic, plain JAX glue).
# ---------------------------------------------------------------------------
def create_projection_matrix(key, m, d):
    # TODO(synk): QR orthogonalization runs host-side in plain JAX (no in-kernel QR).
    nb_full_blocks = m // d
    keys = jax.random.split(key, nb_full_blocks + 1)
    blocks = []
    for idx in range(nb_full_blocks):
        unstructured = jax.random.normal(keys[idx], (d, d), jnp.float32)
        q, _ = jnp.linalg.qr(unstructured)
        blocks.append(q.T)
    final_matrix = jnp.concatenate(blocks, axis=0)                    # [m, d]
    multiplier = jnp.linalg.norm(jax.random.normal(keys[-1], (m, d), jnp.float32), axis=1)
    return multiplier[:, None] * final_matrix                         # diag(mult) @ final


def _reference(z, tau, Wq, bq, Wk, bk, Wv, bv, proj):
    """Pure-JAX reference mirroring the PyTorch forward."""
    q = jnp.einsum('nhd,hed->nhe', z, Wq) + bq[None]
    k = jnp.einsum('nhd,hed->nhe', z, Wk) + bk[None]
    v = jnp.einsum('nhd,hed->nhe', z, Wv) + bv[None]
    q = q / math.sqrt(tau)
    k = k / math.sqrt(tau)

    def sk(data, is_query):
        dn = data.shape[-1] ** (-0.25)
        ratio = proj.shape[0] ** (-0.5)
        dd = jnp.einsum('nhd,md->nhm', dn * data, proj)
        diag = ((data ** 2).sum(-1) / 2.0 * dn ** 2)[..., None]
        if is_query:
            mx = jnp.max(dd, axis=-1, keepdims=True)
        else:
            mx = jnp.max(dd, axis=(-1, -2), keepdims=True)
        return ratio * (jnp.exp(dd - diag - mx) + EPS)

    qk = sk(q, True)
    kk = sk(k, False)
    kvs = jnp.einsum('nhm,nhd->hmd', kk, v)
    num = jnp.einsum('nhm,hmd->nhd', qk, kvs)
    den = (qk * kk.sum(0, keepdims=True)).sum(-1, keepdims=True)
    return jnp.squeeze((num / den).reshape(z.shape[0], -1))


if __name__ == "__main__":
    # KernelAttention(in_channels=32, out_channels=32, num_factor=4, nb_random_features=16)
    N, H, D = 64, 4, 8          # tokens, heads (num_factor), per-head dim
    M = 16                      # nb_random_features (multiple of D so QR blocks tile exactly)
    tau = 0.5

    keys = jax.random.split(jax.random.PRNGKey(0), 8)
    z = jax.random.normal(keys[0], (N, H, D), jnp.float32)
    Wq = jax.random.normal(keys[1], (H, D, D), jnp.float32) * 0.3
    bq = jax.random.normal(keys[2], (H, D), jnp.float32) * 0.05
    Wk = jax.random.normal(keys[3], (H, D, D), jnp.float32) * 0.3
    bk = jax.random.normal(keys[4], (H, D), jnp.float32) * 0.05
    Wv = jax.random.normal(keys[5], (H, D, D), jnp.float32) * 0.3
    bv = jax.random.normal(keys[6], (H, D), jnp.float32) * 0.05
    proj = create_projection_matrix(keys[7], M, D)

    ref = _reference(z, tau, Wq, bq, Wk, bk, Wv, bv, proj)

    # 1) f32 MXU path: exact-semantics check vs the pure-JAX reference.
    out_f32 = kernel_attention_forward(z, tau, Wq, bq, Wk, bk, Wv, bv, proj,
                                       mxu_dtype=jnp.float32)
    out_f32 = jax.block_until_ready(out_f32)
    assert out_f32.shape == (N, H * D), out_f32.shape
    assert jnp.allclose(out_f32, ref, rtol=1e-4, atol=1e-4), \
        float(jnp.max(jnp.abs(out_f32 - ref)))

    # 2) bf16 MXU path (production default per perf review): f32 accumulation,
    #    validated at a bf16-appropriate tolerance against the f32 reference.
    out_bf16 = kernel_attention_forward(z, tau, Wq, bq, Wk, bk, Wv, bv, proj)
    out_bf16 = jax.block_until_ready(out_bf16)
    assert out_bf16.shape == (N, H * D), out_bf16.shape
    assert jnp.allclose(out_bf16, ref, rtol=5e-2, atol=5e-2), \
        float(jnp.max(jnp.abs(out_bf16 - ref)))

    print("KERNEL_OK")
</pallas_src>

<mosaic_0001>
module attributes {stable_mosaic.version = 11 : i64} {
  func.func @_fused_kernel(%arg0: i32, %arg1: i32, %arg2: memref<64x32xf32, #tpu.memory_space<vmem>>, %arg3: memref<32x128xf32, #tpu.memory_space<vmem>>, %arg4: memref<1x128xf32, #tpu.memory_space<vmem>>, %arg5: memref<32x96xf32, #tpu.memory_space<vmem>>, %arg6: memref<1x96xf32, #tpu.memory_space<vmem>>, %arg7: memref<32x64xf32, #tpu.memory_space<vmem>>, %arg8: memref<64x32xf32, #tpu.memory_space<vmem>>, %arg9: memref<64x32xf32, #tpu.memory_space<vmem>>, %arg10: memref<64x32xf32, #tpu.memory_space<vmem>>, %arg11: memref<1x64xf32, #tpu.memory_space<vmem>>) attributes {dimension_semantics = [#tpu.dimension_semantics<arbitrary>, #tpu.dimension_semantics<arbitrary>], iteration_bounds = array<i64: 2, 1>, scalar_prefetch = 0 : i64, scratch_operands = 2 : i64, tpu.core_type = #tpu.core_type<tc>, window_params = [{transform_indices = @transform_0, window_bounds = array<i64: 64, 32>}, {pipeline_mode = #tpu.pipeline_mode<synchronous>, transform_indices = @transform_1, window_bounds = array<i64: 32, 128>}, {pipeline_mode = #tpu.pipeline_mode<synchronous>, transform_indices = @transform_2, window_bounds = array<i64: 1, 128>}, {pipeline_mode = #tpu.pipeline_mode<synchronous>, transform_indices = @transform_3, window_bounds = array<i64: 32, 96>}, {pipeline_mode = #tpu.pipeline_mode<synchronous>, transform_indices = @transform_4, window_bounds = array<i64: 1, 96>}, {pipeline_mode = #tpu.pipeline_mode<synchronous>, transform_indices = @transform_5, window_bounds = array<i64: 32, 64>}, {pipeline_mode = #tpu.pipeline_mode<synchronous>, transform_indices = @transform_6, window_bounds = array<i64: 64, 32>}, {transform_indices = @transform_7, window_bounds = array<i64: 64, 32>}]} {
    %c0_i32 = arith.constant 0 : i32
    %0 = arith.cmpi eq, %arg0, %c0_i32 : i32
    %c0_i32_0 = arith.constant 0 : i32
    %1 = arith.cmpi eq, %arg1, %c0_i32_0 : i32
    %2 = arith.andi %0, %1 : i1
    %3 = arith.extui %2 : i1 to i32
    %c0_i32_1 = arith.constant 0 : i32
    %4 = arith.cmpi ne, %3, %c0_i32_1 : i32
    scf.if %4 {
      %cst = arith.constant 0.000000e+00 : f32
      %17 = vector.broadcast %cst : f32 to vector<64x32xf32>
      %c0_9 = arith.constant 0 : index
      %c0_10 = arith.constant 0 : index
      %18 = vector.load %arg10[%c0_9, %c0_10] : memref<64x32xf32, #tpu.memory_space<vmem>>, vector<64x32xf32>
      tpu.vector_store %arg10[%c0_9, %c0_10], %17 {strides = array<i32>} : memref<64x32xf32, #tpu.memory_space<vmem>>, vector<64x32xf32>,
      %cst_11 = arith.constant 0.000000e+00 : f32
      %19 = vector.broadcast %cst_11 : f32 to vector<1x64xf32>
      %c0_12 = arith.constant 0 : index
      %c0_13 = arith.constant 0 : index
      %20 = vector.load %arg11[%c0_12, %c0_13] : memref<1x64xf32, #tpu.memory_space<vmem>>, vector<1x64xf32>
      tpu.vector_store %arg11[%c0_12, %c0_13], %19 {strides = array<i32>} : memref<1x64xf32, #tpu.memory_space<vmem>>, vector<1x64xf32>,
    } else {
    }
    %c0 = arith.constant 0 : index
    %c0_2 = arith.constant 0 : index
    %5 = vector.load %arg2[%c0, %c0_2] : memref<64x32xf32, #tpu.memory_space<vmem>>, vector<64x32xf32>
    %c0_i32_3 = arith.constant 0 : i32
    %6 = arith.cmpi eq, %arg0, %c0_i32_3 : i32
    %7 = arith.extui %6 : i1 to i32
    %c0_i32_4 = arith.constant 0 : i32
    %8 = arith.cmpi ne, %7, %c0_i32_4 : i32
    scf.if %8 {
      %c0_9 = arith.constant 0 : index
      %c0_10 = arith.constant 0 : index
      %17 = vector.load %arg3[%c0_9, %c0_10] : memref<32x128xf32, #tpu.memory_space<vmem>>, vector<32x128xf32>
      %cst = arith.constant dense<0.000000e+00> : vector<64x128xf32>
      %18 = tpu.matmul %5, %17, %cst {dimension_numbers = #tpu.dot_dimension_numbers<[1], [0], [0], [1], [0, 0, 1, 1], [], []>} : vector<64x32xf32>, vector<32x128xf32>, vector<64x128xf32> -> vector<64x128xf32>
      %c0_11 = arith.constant 0 : index
      %c0_12 = arith.constant 0 : index
      %19 = vector.load %arg4[%c0_11, %c0_12] : memref<1x128xf32, #tpu.memory_space<vmem>>, vector<1x128xf32>
      %20 = vector.broadcast %19 : vector<1x128xf32> to vector<64x128xf32>
      %21 = arith.addf %18, %20 : vector<64x128xf32>
      %22 = vector.extract_strided_slice %21 {offsets = [0, 0], sizes = [64, 32], strides = [1, 1]} : vector<64x128xf32> to vector<64x32xf32>
      %23 = vector.extract_strided_slice %21 {offsets = [0, 32], sizes = [64, 32], strides = [1, 1]} : vector<64x128xf32> to vector<64x32xf32>
      %24 = vector.extract_strided_slice %21 {offsets = [0, 64], sizes = [64, 64], strides = [1, 1]} : vector<64x128xf32> to vector<64x64xf32>
      %25 = arith.mulf %22, %22 : vector<64x32xf32>
      %c0_13 = arith.constant 0 : index
      %c0_14 = arith.constant 0 : index
      %26 = vector.load %arg7[%c0_13, %c0_14] : memref<32x64xf32, #tpu.memory_space<vmem>>, vector<32x64xf32>
      %cst_15 = arith.constant dense<0.000000e+00> : vector<64x64xf32>
      %27 = tpu.matmul %25, %26, %cst_15 {dimension_numbers = #tpu.dot_dimension_numbers<[1], [0], [0], [1], [0, 0, 1, 1], [], []>} : vector<64x32xf32>, vector<32x64xf32>, vector<64x64xf32> -> vector<64x64xf32>
      %cst_16 = arith.constant 0.176776692 : f32
      %28 = vector.broadcast %cst_16 : f32 to vector<64x64xf32>
      %29 = arith.mulf %28, %27 : vector<64x64xf32>
      %cst_17 = arith.constant dense<0xFF800000> : vector<64xf32>
      %30 = vector.multi_reduction <maximumf>, %24, %cst_17 [1] : vector<64x64xf32> to vector<64xf32>
      %31 = vector.shape_cast %30 : vector<64xf32> to vector<64x1xf32>
      %32 = arith.subf %24, %29 : vector<64x64xf32>
      %33 = vector.broadcast %31 : vector<64x1xf32> to vector<64x64xf32>
      %34 = arith.subf %32, %33 : vector<64x64xf32>
      %35 = math.exp %34 : vector<64x64xf32>
      %cst_18 = arith.constant 9.99999974E-5 : f32
      %36 = vector.broadcast %cst_18 : f32 to vector<64x64xf32>
      %37 = arith.addf %35, %36 : vector<64x64xf32>
      %c0_19 = arith.constant 0 : index
      %c0_20 = arith.constant 0 : index
      %38 = vector.load %arg10[%c0_19, %c0_20] : memref<64x32xf32, #tpu.memory_space<vmem>>, vector<64x32xf32>
      "tpu.trace_start"() <{level = 10 : i32, message = "nm,nd->md"}> : () -> ()
      %cst_21 = arith.constant dense<0.000000e+00> : vector<64x32xf32>
      %39 = tpu.matmul %37, %23, %cst_21 {dimension_numbers = #tpu.dot_dimension_numbers<[0], [0], [1], [1], [0, 1, 1, 1], [], []>} : vector<64x64xf32>, vector<64x32xf32>, vector<64x32xf32> -> vector<64x32xf32>
      "tpu.trace_stop"() : () -> ()
      %40 = arith.addf %38, %39 : vector<64x32xf32>
      %c0_22 = arith.constant 0 : index
      %c0_23 = arith.constant 0 : index
      %41 = vector.load %arg10[%c0_22, %c0_23] : memref<64x32xf32, #tpu.memory_space<vmem>>, vector<64x32xf32>
      tpu.vector_store %arg10[%c0_22, %c0_23], %40 {strides = array<i32>} : memref<64x32xf32, #tpu.memory_space<vmem>>, vector<64x32xf32>,
      %c0_24 = arith.constant 0 : index
      %c0_25 = arith.constant 0 : index
      %42 = vector.load %arg11[%c0_24, %c0_25] : memref<1x64xf32, #tpu.memory_space<vmem>>, vector<1x64xf32>
      %cst_26 = arith.constant dense<0.000000e+00> : vector<64xf32>
      %43 = vector.multi_reduction <add>, %37, %cst_26 [0] : vector<64x64xf32> to vector<64xf32>
      %44 = vector.shape_cast %43 : vector<64xf32> to vector<1x64xf32>
      %45 = arith.addf %42, %44 : vector<1x64xf32>
      %c0_27 = arith.constant 0 : index
      %c0_28 = arith.constant 0 : index
      %46 = vector.load %arg11[%c0_27, %c0_28] : memref<1x64xf32, #tpu.memory_space<vmem>>, vector<1x64xf32>
      tpu.vector_store %arg11[%c0_27, %c0_28], %45 {strides = array<i32>} : memref<1x64xf32, #tpu.memory_space<vmem>>, vector<1x64xf32>,
    } else {
    }
    %c0_i32_5 = arith.constant 0 : i32
    %9 = arith.cmpi eq, %arg0, %c0_i32_5 : i32
    %c0_i32_6 = arith.constant 0 : i32
    %10 = arith.cmpi eq, %arg1, %c0_i32_6 : i32
    %11 = arith.andi %9, %10 : i1
    %12 = arith.extui %11 : i1 to i32
    %c0_i32_7 = arith.constant 0 : i32
    %13 = arith.cmpi ne, %12, %c0_i32_7 : i32
    scf.if %13 {
      %c0_9 = arith.constant 0 : index
      %c0_10 = arith.constant 0 : index
      %17 = vector.load %arg10[%c0_9, %c0_10] : memref<64x32xf32, #tpu.memory_space<vmem>>, vector<64x32xf32>
      %c0_11 = arith.constant 0 : index
      %c0_12 = arith.constant 0 : index
      %18 = vector.load %arg8[%c0_11, %c0_12] : memref<64x32xf32, #tpu.memory_space<vmem>>, vector<64x32xf32>
      %19 = arith.mulf %17, %18 : vector<64x32xf32>
      %c0_13 = arith.constant 0 : index
      %c0_14 = arith.constant 0 : index
      %20 = vector.load %arg10[%c0_13, %c0_14] : memref<64x32xf32, #tpu.memory_space<vmem>>, vector<64x32xf32>
      tpu.vector_store %arg10[%c0_13, %c0_14], %19 {strides = array<i32>} : memref<64x32xf32, #tpu.memory_space<vmem>>, vector<64x32xf32>,
    } else {
    }
    %c1_i32 = arith.constant 1 : i32
    %14 = arith.cmpi eq, %arg0, %c1_i32 : i32
    %15 = arith.extui %14 : i1 to i32
    %c0_i32_8 = arith.constant 0 : i32
    %16 = arith.cmpi ne, %15, %c0_i32_8 : i32
    scf.if %16 {
      %c0_9 = arith.constant 0 : index
      %c0_10 = arith.constant 0 : index
      %17 = vector.load %arg5[%c0_9, %c0_10] : memref<32x96xf32, #tpu.memory_space<vmem>>, vector<32x96xf32>
      %cst = arith.constant dense<0.000000e+00> : vector<64x96xf32>
      %18 = tpu.matmul %5, %17, %cst {dimension_numbers = #tpu.dot_dimension_numbers<[1], [0], [0], [1], [0, 0, 1, 1], [], []>} : vector<64x32xf32>, vector<32x96xf32>, vector<64x96xf32> -> vector<64x96xf32>
      %c0_11 = arith.constant 0 : index
      %c0_12 = arith.constant 0 : index
      %19 = vector.load %arg6[%c0_11, %c0_12] : memref<1x96xf32, #tpu.memory_space<vmem>>, vector<1x96xf32>
      %20 = vector.broadcast %19 : vector<1x96xf32> to vector<64x96xf32>
      %21 = arith.addf %18, %20 : vector<64x96xf32>
      %22 = vector.extract_strided_slice %21 {offsets = [0, 0], sizes = [64, 32], strides = [1, 1]} : vector<64x96xf32> to vector<64x32xf32>
      %23 = vector.extract_strided_slice %21 {offsets = [0, 32], sizes = [64, 64], strides = [1, 1]} : vector<64x96xf32> to vector<64x64xf32>
      %24 = arith.mulf %22, %22 : vector<64x32xf32>
      %c0_13 = arith.constant 0 : index
      %c0_14 = arith.constant 0 : index
      %25 = vector.load %arg7[%c0_13, %c0_14] : memref<32x64xf32, #tpu.memory_space<vmem>>, vector<32x64xf32>
      %cst_15 = arith.constant dense<0.000000e+00> : vector<64x64xf32>
      %26 = tpu.matmul %24, %25, %cst_15 {dimension_numbers = #tpu.dot_dimension_numbers<[1], [0], [0], [1], [0, 0, 1, 1], [], []>} : vector<64x32xf32>, vector<32x64xf32>, vector<64x64xf32> -> vector<64x64xf32>
      %cst_16 = arith.constant 0.176776692 : f32
      %27 = vector.broadcast %cst_16 : f32 to vector<64x64xf32>
      %28 = arith.mulf %27, %26 : vector<64x64xf32>
      %29 = tpu.iota {dimensions = array<i32: 1>} : vector<64x64xi32>
      %cst_17 = arith.constant 0.000000e+00 : f32
      %30 = vector.broadcast %cst_17 : f32 to vector<64x64xf32>
      %c0_i32_18 = arith.constant 0 : i32
      %31 = vector.broadcast %c0_i32_18 : i32 to vector<64x64xi32>
      %32 = arith.cmpi sge, %29, %31 : vector<64x64xi32>
      %c16_i32 = arith.constant 16 : i32
      %33 = vector.broadcast %c16_i32 : i32 to vector<64x64xi32>
      %34 = arith.cmpi slt, %29, %33 : vector<64x64xi32>
      %35 = arith.andi %32, %34 : vector<64x64xi1>
      %cst_19 = arith.constant 0xFF800000 : f32
      %36 = vector.broadcast %cst_19 : f32 to vector<64x64xf32>
      %37 = arith.select %35, %23, %36 : vector<64x64xi1>, vector<64x64xf32>
      %cst_20 = arith.constant dense<0xFF800000> : vector<64xf32>
      %38 = vector.multi_reduction <maximumf>, %37, %cst_20 [1] : vector<64x64xf32> to vector<64xf32>
      %39 = vector.shape_cast %38 : vector<64xf32> to vector<64x1xf32>
      %40 = vector.shape_cast %39 : vector<64x1xf32> to vector<64x1xf32>
      %41 = vector.broadcast %40 : vector<64x1xf32> to vector<64x64xf32>
      %42 = arith.select %35, %41, %30 : vector<64x64xi1>, vector<64x64xf32>
      %c16_i32_21 = arith.constant 16 : i32
      %43 = vector.broadcast %c16_i32_21 : i32 to vector<64x64xi32>
      %44 = arith.cmpi sge, %29, %43 : vector<64x64xi32>
      %c32_i32 = arith.constant 32 : i32
      %45 = vector.broadcast %c32_i32 : i32 to vector<64x64xi32>
      %46 = arith.cmpi slt, %29, %45 : vector<64x64xi32>
      %47 = arith.andi %44, %46 : vector<64x64xi1>
      %cst_22 = arith.constant 0xFF800000 : f32
      %48 = vector.broadcast %cst_22 : f32 to vector<64x64xf32>
      %49 = arith.select %47, %23, %48 : vector<64x64xi1>, vector<64x64xf32>
      %cst_23 = arith.constant dense<0xFF800000> : vector<64xf32>
      %50 = vector.multi_reduction <maximumf>, %49, %cst_23 [1] : vector<64x64xf32> to vector<64xf32>
      %51 = vector.shape_cast %50 : vector<64xf32> to vector<64x1xf32>
      %52 = vector.shape_cast %51 : vector<64x1xf32> to vector<64x1xf32>
      %53 = vector.broadcast %52 : vector<64x1xf32> to vector<64x64xf32>
      %54 = arith.select %47, %53, %42 : vector<64x64xi1>, vector<64x64xf32>
      %c32_i32_24 = arith.constant 32 : i32
      %55 = vector.broadcast %c32_i32_24 : i32 to vector<64x64xi32>
      %56 = arith.cmpi sge, %29, %55 : vector<64x64xi32>
      %c48_i32 = arith.constant 48 : i32
      %57 = vector.broadcast %c48_i32 : i32 to vector<64x64xi32>
      %58 = arith.cmpi slt, %29, %57 : vector<64x64xi32>
      %59 = arith.andi %56, %58 : vector<64x64xi1>
      %cst_25 = arith.constant 0xFF800000 : f32
      %60 = vector.broadcast %cst_25 : f32 to vector<64x64xf32>
      %61 = arith.select %59, %23, %60 : vector<64x64xi1>, vector<64x64xf32>
      %cst_26 = arith.constant dense<0xFF800000> : vector<64xf32>
      %62 = vector.multi_reduction <maximumf>, %61, %cst_26 [1] : vector<64x64xf32> to vector<64xf32>
      %63 = vector.shape_cast %62 : vector<64xf32> to vector<64x1xf32>
      %64 = vector.shape_cast %63 : vector<64x1xf32> to vector<64x1xf32>
      %65 = vector.broadcast %64 : vector<64x1xf32> to vector<64x64xf32>
      %66 = arith.select %59, %65, %54 : vector<64x64xi1>, vector<64x64xf32>
      %c48_i32_27 = arith.constant 48 : i32
      %67 = vector.broadcast %c48_i32_27 : i32 to vector<64x64xi32>
      %68 = arith.cmpi sge, %29, %67 : vector<64x64xi32>
      %c64_i32 = arith.constant 64 : i32
      %69 = vector.broadcast %c64_i32 : i32 to vector<64x64xi32>
      %70 = arith.cmpi slt, %29, %69 : vector<64x64xi32>
      %71 = arith.andi %68, %70 : vector<64x64xi1>
      %cst_28 = arith.constant 0xFF800000 : f32
      %72 = vector.broadcast %cst_28 : f32 to vector<64x64xf32>
      %73 = arith.select %71, %23, %72 : vector<64x64xi1>, vector<64x64xf32>
      %cst_29 = arith.constant dense<0xFF800000> : vector<64xf32>
      %74 = vector.multi_reduction <maximumf>, %73, %cst_29 [1] : vector<64x64xf32> to vector<64xf32>
      %75 = vector.shape_cast %74 : vector<64xf32> to vector<64x1xf32>
      %76 = vector.shape_cast %75 : vector<64x1xf32> to vector<64x1xf32>
      %77 = vector.broadcast %76 : vector<64x1xf32> to vector<64x64xf32>
      %78 = arith.select %71, %77, %66 : vector<64x64xi1>, vector<64x64xf32>
      %79 = arith.subf %23, %28 : vector<64x64xf32>
      %80 = arith.subf %79, %78 : vector<64x64xf32>
      %81 = math.exp %80 : vector<64x64xf32>
      %cst_30 = arith.constant 9.99999974E-5 : f32
      %82 = vector.broadcast %cst_30 : f32 to vector<64x64xf32>
      %83 = arith.addf %81, %82 : vector<64x64xf32>
      %c0_31 = arith.constant 0 : index
      %c0_32 = arith.constant 0 : index
      %84 = vector.load %arg10[%c0_31, %c0_32] : memref<64x32xf32, #tpu.memory_space<vmem>>, vector<64x32xf32>
      %cst_33 = arith.constant dense<0.000000e+00> : vector<64x32xf32>
      %85 = tpu.matmul %83, %84, %cst_33 {dimension_numbers = #tpu.dot_dimension_numbers<[1], [0], [0], [1], [0, 0, 1, 1], [], []>} : vector<64x64xf32>, vector<64x32xf32>, vector<64x32xf32> -> vector<64x32xf32>
      %c0_34 = arith.constant 0 : index
      %c0_35 = arith.constant 0 : index
      %86 = vector.load %arg11[%c0_34, %c0_35] : memref<1x64xf32, #tpu.memory_space<vmem>>, vector<1x64xf32>
      %87 = vector.broadcast %86 : vector<1x64xf32> to vector<64x64xf32>
      %88 = arith.mulf %83, %87 : vector<64x64xf32>
      %c0_36 = arith.constant 0 : index
      %c0_37 = arith.constant 0 : index
      %89 = vector.load %arg8[%c0_36, %c0_37] : memref<64x32xf32, #tpu.memory_space<vmem>>, vector<64x32xf32>
      %cst_38 = arith.constant dense<0.000000e+00> : vector<64x32xf32>
      %90 = tpu.matmul %88, %89, %cst_38 {dimension_numbers = #tpu.dot_dimension_numbers<[1], [0], [0], [1], [0, 0, 1, 1], [], []>} : vector<64x64xf32>, vector<64x32xf32>, vector<64x32xf32> -> vector<64x32xf32>
      %91 = tpu.reciprocal %90 {approx = true} : vector<64x32xf32> -> vector<64x32xf32>
      %92 = arith.mulf %90, %91 : vector<64x32xf32>
      %cst_39 = arith.constant 2.000000e+00 : f32
      %93 = vector.broadcast %cst_39 : f32 to vector<64x32xf32>
      %94 = arith.subf %93, %92 : vector<64x32xf32>
      %95 = arith.mulf %91, %94 : vector<64x32xf32>
      %96 = arith.mulf %85, %95 : vector<64x32xf32>
      %c0_40 = arith.constant 0 : index
      %c0_41 = arith.constant 0 : index
      %97 = vector.load %arg9[%c0_40, %c0_41] : memref<64x32xf32, #tpu.memory_space<vmem>>, vector<64x32xf32>
      tpu.vector_store %arg9[%c0_40, %c0_41], %96 {strides = array<i32>} : memref<64x32xf32, #tpu.memory_space<vmem>>, vector<64x32xf32>,
    } else {
    }
    return
  }
  func.func @transform_0(%arg0: i32, %arg1: i32) -> (i32, i32) {
    %c0_i32 = arith.constant 0 : i32
    %c0_i32_0 = arith.constant 0 : i32
    return %arg1, %c0_i32 : i32, i32
  }
  func.func @transform_1(%arg0: i32, %arg1: i32) -> (i32, i32) {
    %c0_i32 = arith.constant 0 : i32
    %c0_i32_0 = arith.constant 0 : i32
    %c0_i32_1 = arith.constant 0 : i32
    return %c0_i32, %c0_i32_0 : i32, i32
  }
  func.func @transform_2(%arg0: i32, %arg1: i32) -> (i32, i32) {
    %c0_i32 = arith.constant 0 : i32
    %c0_i32_0 = arith.constant 0 : i32
    %c0_i32_1 = arith.constant 0 : i32
    return %c0_i32, %c0_i32_0 : i32, i32
  }
  func.func @transform_3(%arg0: i32, %arg1: i32) -> (i32, i32) {
    %c0_i32 = arith.constant 0 : i32
    %c0_i32_0 = arith.constant 0 : i32
    %c0_i32_1 = arith.constant 0 : i32
    return %c0_i32, %c0_i32_0 : i32, i32
  }
  func.func @transform_4(%arg0: i32, %arg1: i32) -> (i32, i32) {
    %c0_i32 = arith.constant 0 : i32
    %c0_i32_0 = arith.constant 0 : i32
    %c0_i32_1 = arith.constant 0 : i32
    return %c0_i32, %c0_i32_0 : i32, i32
  }
  func.func @transform_5(%arg0: i32, %arg1: i32) -> (i32, i32) {
    %c0_i32 = arith.constant 0 : i32
    %c0_i32_0 = arith.constant 0 : i32
    %c0_i32_1 = arith.constant 0 : i32
    return %c0_i32, %c0_i32_0 : i32, i32
  }
  func.func @transform_6(%arg0: i32, %arg1: i32) -> (i32, i32) {
    %c0_i32 = arith.constant 0 : i32
    %c0_i32_0 = arith.constant 0 : i32
    %c0_i32_1 = arith.constant 0 : i32
    return %c0_i32, %c0_i32_0 : i32, i32
  }
  func.func @transform_7(%arg0: i32, %arg1: i32) -> (i32, i32) {
    %0 = arith.muli %arg0, %arg1 : i32
    %c0_i32 = arith.constant 0 : i32
    %c0_i32_0 = arith.constant 0 : i32
    return %0, %c0_i32 : i32, i32
  }
}

</mosaic_0001>

<llo_original>
// kernel: tpu_custom_call.1
$region0: #{tpu_custom_call.1}
  #allocation0 [shape = 'u32[]', space=smem, size = 0x4, offset = 0x4, fixed_abs, tag = 'smem constant byte address 0x4 - core index']
  #allocation1 [shape = 'u32[144,128]{1,0:T(1,128)}', space=vmem, size = 0x12000, scoped, tag = 'internal scratch']
  #allocation2 [shape = 'f32[64,32]{1,0:T(8,128)}', space=vmem, size = 0x8000, scoped, tag = 'scratch operand']
  #allocation3 [shape = 'f32[1,64]{1,0:T(1,128)}', space=vmem, size = 0x200, scoped, tag = 'scratch operand']
  %s0 = inlined_call_operand.vmem [shape: f32[64,32], index: 0, kind: input, shape index: {}]
  %s1 = inlined_call_operand.vmem [shape: f32[32,128], index: 1, kind: input, shape index: {}]
  %s2 = inlined_call_operand.vmem [shape: f32[1,128], index: 2, kind: input, shape index: {}]
  %s3 = inlined_call_operand.vmem [shape: f32[32,96], index: 3, kind: input, shape index: {}]
  %s4 = inlined_call_operand.vmem [shape: f32[1,96], index: 4, kind: input, shape index: {}]
  %s5 = inlined_call_operand.vmem [shape: f32[32,64], index: 5, kind: input, shape index: {}]
  %s6 = inlined_call_operand.vmem [shape: f32[64,32], index: 6, kind: input, shape index: {}]
  %s7 = inlined_call_operand.vmem [shape: f32[64,32], index: 7, kind: output, shape index: {}]
  %s8 = sld [smem:[#allocation0]]
  $region77: #{tpu_custom_call.1} parent=0
    _
  %s10 = ssub.s32 1, %s8
  %s11 = scalar_select 0, %s10, %s8
  loop: start=0, step=1, limit=4
  $region2: #{tpu_custom_call.1} parent=0 // loop_pre_header
    _
  $region3: #{tpu_custom_call.1} parent=0 // loop_header
    %s13 = sphi 0, %s17
    %p14 = scmp.ge.s32.totalorder %s13, 4
    %s20 = sphi 0, %s32
    %s21 = sphi 0, %s28
    %s22 = sphi 0, %s20
    %s23 = sphi 0, %s21
    %s24 = sphi 0, %s22
    %s25 = sphi 0, %s23
    %s35 = sphi 0, %s37
    %s38 = sphi 0, %s35
    %s39 = sphi 0, %s38
    %s55 = sphi 0, %s39
    %s59 = sphi 0, %s59
    %s61 = sphi 0, %s59
    %s62 = sphi 0, %s61
    %s76 = sphi 0, %s62
    %s80 = sphi 0, %s80
    %s82 = sphi 0, %s80
    %s83 = sphi 0, %s82
    %s97 = sphi 0, %s83
    %s101 = sphi 0, %s101
    %s103 = sphi 0, %s101
    %s104 = sphi 0, %s103
    %s118 = sphi 0, %s104
    %s122 = sphi 0, %s122
    %s124 = sphi 0, %s122
    %s125 = sphi 0, %s124
    %s139 = sphi 0, %s125
    %s143 = sphi 0, %s143
    %s145 = sphi 0, %s143
    %s146 = sphi 0, %s145
    %s160 = sphi 0, %s146
    %s164 = sphi 0, %s164
    %s166 = sphi 0, %s164
    %s167 = sphi 0, %s166
    %s181 = sphi 0, %s167
    %s189 = sphi 0, %s191
    %s192 = sphi 0, %s189
    %s193 = sphi 0, %s192
    %s209 = sphi 0, %s193
  $region4: #{tpu_custom_call.1} parent=0 // loop_header_branch
    %16 = sbr.rel (%p14) target = $region8
  $region5: #{tpu_custom_call.1} parent=0 // loop_body
    %s18 = ssub.s32 %s13, 1
    %s19 = ssub.s32 %s13, 2
    %s26 = sadd.s32 1, %s21
    %p27 = scmp.ge.s32.totalorder %s26, 1
    %s28 = scalar_select %p27, 0, %s26
    %s29 = sadd.s32 1, %s20
    %s30 = scalar_select %p27, %s29, %s20
    %p31 = scmp.ge.s32.totalorder %s30, 2
    %s32 = scalar_select %p31, 0, %s30
    %s33 = ssub.s32 %s21, %s28
    %p34 = scmp.eq.s32.totalorder %s33, 0
    %s36 = sadd.s32 %s35, 1
    %s37 = scalar_select %p34, %s35, %s36
    %p40 = pneg %p34
    %p41 = scmp.eq.s32.totalorder %s13, 1
    %p42 = por %p40, %p41
    %p43 = scmp.ne.s32.totalorder %s35, %s38
    %p44 = scmp.eq.s32.totalorder %s13, 0
    %p45 = por %p43, %p44
    %p46 = scmp.ne.s32.totalorder %s35, %s38
    %p47 = scmp.eq.s32.totalorder %s18, 1
    %p48 = por %p46, %p47
    %p49 = scmp.ne.s32.totalorder %s38, %s39
    %p50 = scmp.eq.s32.totalorder %s18, 0
    %p51 = por %p49, %p50
    %p52 = scmp.ne.s32.totalorder %s38, %s39
    %p53 = scmp.eq.s32.totalorder %s19, 1
    %p54 = por %p52, %p53
    %p56 = scmp.ne.s32.totalorder %s39, %s55
    %p57 = scmp.eq.s32.totalorder %s19, 0
    %p58 = por %p56, %p57
    %s60 = sadd.s32 %s59, 1
    %p63 = scmp.eq.s32.totalorder %s13, 1
    %p64 = scmp.ne.s32.totalorder %s59, %s61
    %p65 = scmp.eq.s32.totalorder %s13, 0
    %p66 = por %p64, %p65
    %p67 = scmp.ne.s32.totalorder %s59, %s61
    %p68 = scmp.eq.s32.totalorder %s18, 1
    %p69 = por %p67, %p68
    %p70 = scmp.ne.s32.totalorder %s61, %s62
    %p71 = scmp.eq.s32.totalorder %s18, 0
    %p72 = por %p70, %p71
    %p73 = scmp.ne.s32.totalorder %s61, %s62
    %p74 = scmp.eq.s32.totalorder %s19, 1
    %p75 = por %p73, %p74
    %p77 = scmp.ne.s32.totalorder %s62, %s76
    %p78 = scmp.eq.s32.totalorder %s19, 0
    %p79 = por %p77, %p78
    %s81 = sadd.s32 %s80, 1
    %p84 = scmp.eq.s32.totalorder %s13, 1
    %p85 = scmp.ne.s32.totalorder %s80, %s82
    %p86 = scmp.eq.s32.totalorder %s13, 0
    %p87 = por %p85, %p86
    %p88 = scmp.ne.s32.totalorder %s80, %s82
    %p89 = scmp.eq.s32.totalorder %s18, 1
    %p90 = por %p88, %p89
    %p91 = scmp.ne.s32.totalorder %s82, %s83
    %p92 = scmp.eq.s32.totalorder %s18, 0
    %p93 = por %p91, %p92
    %p94 = scmp.ne.s32.totalorder %s82, %s83
    %p95 = scmp.eq.s32.totalorder %s19, 1
    %p96 = por %p94, %p95
    %p98 = scmp.ne.s32.totalorder %s83, %s97
    %p99 = scmp.eq.s32.totalorder %s19, 0
    %p100 = por %p98, %p99
    %s102 = sadd.s32 %s101, 1
    %p105 = scmp.eq.s32.totalorder %s13, 1
    %p106 = scmp.ne.s32.totalorder %s101, %s103
    %p107 = scmp.eq.s32.totalorder %s13, 0
    %p108 = por %p106, %p107
    %p109 = scmp.ne.s32.totalorder %s101, %s103
    %p110 = scmp.eq.s32.totalorder %s18, 1
    %p111 = por %p109, %p110
    %p112 = scmp.ne.s32.totalorder %s103, %s104
    %p113 = scmp.eq.s32.totalorder %s18, 0
    %p114 = por %p112, %p113
    %p115 = scmp.ne.s32.totalorder %s103, %s104
    %p116 = scmp.eq.s32.totalorder %s19, 1
    %p117 = por %p115, %p116
    %p119 = scmp.ne.s32.totalorder %s104, %s118
    %p120 = scmp.eq.s32.totalorder %s19, 0
    %p121 = por %p119, %p120
    %s123 = sadd.s32 %s122, 1
    %p126 = scmp.eq.s32.totalorder %s13, 1
    %p127 = scmp.ne.s32.totalorder %s122, %s124
    %p128 = scmp.eq.s32.totalorder %s13, 0
    %p129 = por %p127, %p128
    %p130 = scmp.ne.s32.totalorder %s122, %s124
    %p131 = scmp.eq.s32.totalorder %s18, 1
    %p132 = por %p130, %p131
    %p133 = scmp.ne.s32.totalorder %s124, %s125
    %p134 = scmp.eq.s32.totalorder %s18, 0
    %p135 = por %p133, %p134
    %p136 = scmp.ne.s32.totalorder %s124, %s125
    %p137 = scmp.eq.s32.totalorder %s19, 1
    %p138 = por %p136, %p137
    %p140 = scmp.ne.s32.totalorder %s125, %s139
    %p141 = scmp.eq.s32.totalorder %s19, 0
    %p142 = por %p140, %p141
    %s144 = sadd.s32 %s143, 1
    %p147 = scmp.eq.s32.totalorder %s13, 1
    %p148 = scmp.ne.s32.totalorder %s143, %s145
    %p149 = scmp.eq.s32.totalorder %s13, 0
    %p150 = por %p148, %p149
    %p151 = scmp.ne.s32.totalorder %s143, %s145
    %p152 = scmp.eq.s32.totalorder %s18, 1
    %p153 = por %p151, %p152
    %p154 = scmp.ne.s32.totalorder %s145, %s146
    %p155 = scmp.eq.s32.totalorder %s18, 0
    %p156 = por %p154, %p155
    %p157 = scmp.ne.s32.totalorder %s145, %s146
    %p158 = scmp.eq.s32.totalorder %s19, 1
    %p159 = por %p157, %p158
    %p161 = scmp.ne.s32.totalorder %s146, %s160
    %p162 = scmp.eq.s32.totalorder %s19, 0
    %p163 = por %p161, %p162
    %s165 = sadd.s32 %s164, 1
    %p168 = scmp.eq.s32.totalorder %s13, 1
    %p169 = scmp.ne.s32.totalorder %s164, %s166
    %p170 = scmp.eq.s32.totalorder %s13, 0
    %p171 = por %p169, %p170
    %p172 = scmp.ne.s32.totalorder %s164, %s166
    %p173 = scmp.eq.s32.totalorder %s18, 1
    %p174 = por %p172, %p173
    %p175 = scmp.ne.s32.totalorder %s166, %s167
    %p176 = scmp.eq.s32.totalorder %s18, 0
    %p177 = por %p175, %p176
    %p178 = scmp.ne.s32.totalorder %s166, %s167
    %p179 = scmp.eq.s32.totalorder %s19, 1
    %p180 = por %p178, %p179
    %p182 = scmp.ne.s32.totalorder %s167, %s181
    %p183 = scmp.eq.s32.totalorder %s19, 0
    %p184 = por %p182, %p183
    %s185 = smul.u32 %s20, %s21
    %s186 = smul.u32 %s32, %s28
    %s187 = ssub.s32 %s185, %s186
    %p188 = scmp.eq.s32.totalorder %s187, 0
    %s190 = sadd.s32 %s189, 1
    %s191 = scalar_select %p188, %s189, %s190
    %p194 = pneg %p188
    %p195 = scmp.eq.s32.totalorder %s13, 1
    %p196 = por %p194, %p195
    %p197 = scmp.ne.s32.totalorder %s189, %s192
    %p198 = scmp.eq.s32.totalorder %s13, 0
    %p199 = por %p197, %p198
    %p200 = scmp.ne.s32.totalorder %s189, %s192
    %p201 = scmp.eq.s32.totalorder %s18, 1
    %p202 = por %p200, %p201
    %p203 = scmp.ne.s32.totalorder %s192, %s193
    %p204 = scmp.eq.s32.totalorder %s18, 0
    %p205 = por %p203, %p204
    %p206 = scmp.ne.s32.totalorder %s192, %s193
    %p207 = scmp.eq.s32.totalorder %s19, 1
    %p208 = por %p206, %p207
    %p210 = scmp.ne.s32.totalorder %s193, %s209
    %p211 = scmp.eq.s32.totalorder %s19, 0
    %p212 = por %p210, %p211
    %p213 = scmp.le.s32.totalorder 1, %s13
    %p214 = scmp.lt.s32.totalorder %s13, 3
    %p215 = pnand %p213, %p214
    %p216 = pneg %p215
    // Predicated region
    $region9: #{tpu_custom_call.1} parent=5 // pred_check
      _
    $region10: #{tpu_custom_call.1} parent=5 // pred_check_branch
      %218 = sbr.rel (%p215) target = $region12
    $region11: #{tpu_custom_call.1} parent=5 // pred_region
      %s219 = ssub.s32 %s13, 1
      // Predicated region
      $region13: #{tpu_custom_call.1} parent=11 // pred_check
        %p220 = pneg %p51
      $region14: #{tpu_custom_call.1} parent=11 // pred_check_branch
        %222 = sbr.rel (%p220) target = $region16
      $region15: #{tpu_custom_call.1} parent=11 // pred_region
        %s223 = smul.u32 8, %s23
        %p224 = scmp.lt.s32.totalorder %s223, 7
        %s225 = scalar_select %p224, %s223, 7
        %s226 = smul.addr %s225, 8
        %s227 = scalar_lea.vmem %s0, %s226
        %s228 = smul.u32 8, %s23
      $region16: #{tpu_custom_call.1} parent=11 // pred_fallthru
        _
      // Predicated region
      $region17: #{tpu_custom_call.1} parent=11 // pred_check
        %p229 = pneg %p72
      $region18: #{tpu_custom_call.1} parent=11 // pred_check_branch
        %231 = sbr.rel (%p229) target = $region20
      $region19: #{tpu_custom_call.1} parent=11 // pred_region
        _
      $region20: #{tpu_custom_call.1} parent=11 // pred_fallthru
        _
      // Predicated region
      $region21: #{tpu_custom_call.1} parent=11 // pred_check
        %p232 = pneg %p93
      $region22: #{tpu_custom_call.1} parent=11 // pred_check_branch
        %234 = sbr.rel (%p232) target = $region24
      $region23: #{tpu_custom_call.1} parent=11 // pred_region
        _
      $region24: #{tpu_custom_call.1} parent=11 // pred_fallthru
        _
      // Predicated region
      $region25: #{tpu_custom_call.1} parent=11 // pred_check
        %p235 = pneg %p114
      $region26: #{tpu_custom_call.1} parent=11 // pred_check_branch
        %237 = sbr.rel (%p235) target = $region28
      $region27: #{tpu_custom_call.1} parent=11 // pred_region
        _
      $region28: #{tpu_custom_call.1} parent=11 // pred_fallthru
        _
      // Predicated region
      $region29: #{tpu_custom_call.1} parent=11 // pred_check
        %p238 = pneg %p135
      $region30: #{tpu_custom_call.1} parent=11 // pred_check_branch
        %240 = sbr.rel (%p238) target = $region32
      $region31: #{tpu_custom_call.1} parent=11 // pred_region
        _
      $region32: #{tpu_custom_call.1} parent=11 // pred_fallthru
        _
      // Predicated region
      $region33: #{tpu_custom_call.1} parent=11 // pred_check
        %p241 = pneg %p156
      $region34: #{tpu_custom_call.1} parent=11 // pred_check_branch
        %243 = sbr.rel (%p241) target = $region36
      $region35: #{tpu_custom_call.1} parent=11 // pred_region
        _
      $region36: #{tpu_custom_call.1} parent=11 // pred_fallthru
        _
      // Predicated region
      $region37: #{tpu_custom_call.1} parent=11 // pred_check
        %p244 = pneg %p177
      $region38: #{tpu_custom_call.1} parent=11 // pred_check_branch
        %246 = sbr.rel (%p244) target = $region40
      $region39: #{tpu_custom_call.1} parent=11 // pred_region
        _
      $region40: #{tpu_custom_call.1} parent=11 // pred_fallthru
        _
    $region12: #{tpu_custom_call.1} parent=5 // pred_fallthru
      _
    %p247 = scmp.lt.s32.totalorder %s13, 2
    // Predicated region
    $region41: #{tpu_custom_call.1} parent=5 // pred_check
      %p248 = pneg %p247
    $region42: #{tpu_custom_call.1} parent=5 // pred_check_branch
      %250 = sbr.rel (%p248) target = $region44
    $region43: #{tpu_custom_call.1} parent=5 // pred_region
      _
    $region44: #{tpu_custom_call.1} parent=5 // pred_fallthru
      _
    %p251 = scmp.le.s32.totalorder 1, %s13
    %p252 = scmp.lt.s32.totalorder %s13, 3
    %p253 = pnand %p251, %p252
    %p254 = pneg %p253
    // Predicated region
    $region45: #{tpu_custom_call.1} parent=5 // pred_check
      _
    $region46: #{tpu_custom_call.1} parent=5 // pred_check_branch
      %256 = sbr.rel (%p253) target = $region48
    $region47: #{tpu_custom_call.1} parent=5 // pred_region
      %s257 = ssub.s32 %s13, 1
      %s258 = smul.u32 8, %s23
      %p259 = scmp.lt.s32.totalorder %s258, 7
      %s260 = scalar_select %p259, %s258, 7
      %s261 = smul.addr %s260, 8
      %s262 = scalar_lea.vmem %s0, %s261
      %p263 = pneg %p51
      %p264 = pneg %p48
      %p265 = pneg %p72
      %p266 = pneg %p69
      %p267 = pneg %p93
      %p268 = pneg %p90
      %p269 = pneg %p114
      %p270 = pneg %p111
      %p271 = pneg %p135
      %p272 = pneg %p132
      %p273 = pneg %p156
      %p274 = pneg %p153
      %p275 = pneg %p177
      %p276 = pneg %p174
      %p277 = pneg %p205
      %p278 = pneg %p202
      %s279 = smul.u32 %s22, %s23
      %s280 = smul.u32 8, %s279
      %p281 = scmp.lt.s32.totalorder %s280, 7
      %s282 = scalar_select %p281, %s280, 7
      %s283 = smul.addr %s282, 8
      %s284 = scalar_lea.vmem %s7, %s283
      %s285 = smul.u32 8, %s23
      %p286 = scmp.lt.s32.totalorder %s285, 7
      %s287 = scalar_select %p286, %s285, 7
      %s288 = smul.addr %s287, 8
      %s289 = scalar_lea.vmem %s0, %s288
      %s290 = smul.u32 8, %s23
      %s291 = smul.u32 %s22, %s23
      %s292 = smul.u32 8, %s291
      %p293 = scmp.lt.s32.totalorder %s292, 7
      %s294 = scalar_select %p293, %s292, 7
      %s295 = smul.addr %s294, 8
      %s296 = scalar_lea.vmem %s7, %s295
      %s297 = smul.u32 %s22, %s23
      %s298 = smul.u32 8, %s297
      %p299 = scmp.eq.s32.totalorder %s22, 0
      %p300 = scmp.eq.s32.totalorder %s23, 0
      %p301 = pnand %p299, %p300
      %p302 = pneg %p301
      // Predicated region
      $region49: #{tpu_custom_call.1} parent=47 // pred_check
        _
      $region50: #{tpu_custom_call.1} parent=47 // pred_check_branch
        %304 = sbr.rel (%p301) target = $region52
      $region51: #{tpu_custom_call.1} parent=47 // pred_region
        %vm305 = vcmask 261120
        %306 = vst.msk [vmem:[#allocation2] sm:$0xff] %vm305, 0.0
        %307 = vst.msk [vmem:[#allocation2 + $0x8] sm:$0xff] %vm305, 0.0
        %308 = vst.msk [vmem:[#allocation2 + $0x10] sm:$0xff] %vm305, 0.0
        %309 = vst.msk [vmem:[#allocation2 + $0x18] sm:$0xff] %vm305, 0.0
        %310 = vst.msk [vmem:[#allocation2 + $0x20] sm:$0xff] %vm305, 0.0
        %311 = vst.msk [vmem:[#allocation2 + $0x28] sm:$0xff] %vm305, 0.0
        %312 = vst.msk [vmem:[#allocation2 + $0x30] sm:$0xff] %vm305, 0.0
        %313 = vst.msk [vmem:[#allocation2 + $0x38] sm:$0xff] %vm305, 0.0
        %vm314 = vcmask 516096
        %315 = vst.msk [vmem:[#allocation3] sm:$0x1] %vm314, 0.0
      $region52: #{tpu_custom_call.1} parent=47 // pred_fallthru
        _
      %v316 = vld [vmem:[%s289] sm:$0xff]
      %v317 = vld [vmem:[%s289 + $0x8] sm:$0xff]
      %v318 = vld [vmem:[%s289 + $0x10] sm:$0xff]
      %v319 = vld [vmem:[%s289 + $0x18] sm:$0xff]
      %v320 = vld [vmem:[%s289 + $0x20] sm:$0xff]
      %v321 = vld [vmem:[%s289 + $0x28] sm:$0xff]
      %v322 = vld [vmem:[%s289 + $0x30] sm:$0xff]
      %v323 = vld [vmem:[%s289 + $0x38] sm:$0xff]
      // Predicated region
      $region53: #{tpu_custom_call.1} parent=47 // pred_check
        %p324 = pneg %p299
      $region54: #{tpu_custom_call.1} parent=47 // pred_check_branch
        %326 = sbr.rel (%p324) target = $region56
      $region55: #{tpu_custom_call.1} parent=47 // pred_region
        %v327 = vld [vmem:[%s1] sm:$0xff]
        %v328 = vld [vmem:[%s1 + $0x8] sm:$0xff]
        %v329 = vld [vmem:[%s1 + $0x10] sm:$0xff]
        %v330 = vld [vmem:[%s1 + $0x18] sm:$0xff]
        %v331 = vld [vmem:[%s2] sm:$0x1]
        %v333 = vlaneseq
        %v334 = vshrl.u32 %v333, 7
        %v335 = vsub.s32 0, %v334
        %v336 = vrot.slane %v331, %v335
        %vm338 = vcmask 261120
        %v340 = vsel %vm338, %v316, 0
        %v343 = vsel %vm338, %v317, 0
        %v346 = vsel %vm338, %v318, 0
        %v349 = vsel %vm338, %v319, 0
        %v352 = vsel %vm338, %v320, 0
        %v355 = vsel %vm338, %v321, 0
        %v358 = vsel %vm338, %v322, 0
        %v361 = vsel %vm338, %v323, 0
        %363 = vmatprep.subr.mxu0 0.0
        %364 = vmatpush1.msra.mxu0 %v327
        %365 = vmatprep.subr.mxu0 0.0
        %366 = vmatpush1.msra.mxu0 %v328
        %367 = vmatprep.subr.mxu0 0.0
        %368 = vmatpush1.msra.mxu0 %v329
        %369 = vmatprep.subr.mxu0 0.0
        %370 = vmatpush1.msra.mxu0 %v330
        %371 = vmatprep.subr.mxu0 0.0
        %372 = vmatpush1.msra.mxu0 0.0
        %373 = vmatprep.subr.mxu0 0.0
        %374 = vmatpush1.msra.mxu0 0.0
        %375 = vmatprep.subr.mxu0 0.0
        %376 = vmatpush1.msra.mxu0 0.0
        %377 = vmatprep.subr.mxu0 0.0
        %378 = vmatpush1.msra.mxu0 0.0
        %379 = vmatprep.subr.mxu0 0.0
        %380 = vmatpush1.msra.mxu0 0.0
        %381 = vmatprep.subr.mxu0 0.0
        %382 = vmatpush1.msra.mxu0 0.0
        %383 = vmatprep.subr.mxu0 0.0
        %384 = vmatpush1.msra.mxu0 0.0
        %385 = vmatprep.subr.mxu0 0.0
        %386 = vmatpush1.msra.mxu0 0.0
        %387 = vmatprep.subr.mxu0 0.0
        %388 = vmatpush1.msra.mxu0 0.0
        %389 = vmatprep.subr.mxu0 0.0
        %390 = vmatpush1.msra.mxu0 0.0
        %391 = vmatprep.subr.mxu0 0.0
        %392 = vmatpush1.msra.mxu0 0.0
        %393 = vmatprep.subr.mxu0 0.0
        %394 = vmatpush1.msra.mxu0 0.0
        %395 = vmatprep.subr.mxu0 0.0
        %396 = vmatpush1.msra.mxu0 0.0
        %397 = vmatprep.subr.mxu0 0.0
        %398 = vmatpush1.msra.mxu0 0.0
        %399 = vmatprep.subr.mxu0 0.0
        %400 = vmatpush1.msra.mxu0 0.0
        %401 = vmatprep.subr.mxu0 0.0
        %402 = vmatpush1.msra.mxu0 0.0
        %403 = vmatprep.subr.mxu0 0.0
        %404 = vmatpush1.msra.mxu0 0.0
        %405 = vmatprep.subr.mxu0 0.0
        %406 = vmatpush1.msra.mxu0 0.0
        %407 = vmatprep.subr.mxu0 0.0
        %408 = vmatpush1.msra.mxu0 0.0
        %409 = vmatprep.subr.mxu0 0.0
        %410 = vmatpush1.msra.mxu0 0.0
        %411 = vmatprep.subr.mxu0 0.0
        %412 = vmatpush1.msra.mxu0 0.0
        %413 = vmatprep.subr.mxu0 0.0
        %414 = vmatpush1.msra.mxu0 0.0
        %415 = vmatprep.subr.mxu0 0.0
        %416 = vmatpush1.msra.mxu0 0.0
        %417 = vmatprep.subr.mxu0 0.0
        %418 = vmatpush1.msra.mxu0 0.0
        %419 = vmatprep.subr.mxu0 0.0
        %420 = vmatpush1.msra.mxu0 0.0
        %421 = vmatprep.subr.mxu0 0.0
        %422 = vmatpush1.msra.mxu0 0.0
        %423 = vmatprep.subr.mxu0 0.0
        %424 = vmatpush1.msra.mxu0 0.0
        %425 = vmatprep.subr.mxu0 0.0
        %426 = vmatpush1.msra.mxu0 0.0
        %427 = vmatprep.mubr.f32.mxu0 0.0
        %428 = vmatmul.mubr.f32.gmra.mrb[0].mxu0 %v340
        %v429 = vpop.f32.mrb[0].mxu0
        %v430 = vadd.f32 %v336, %v429
        %v431 = vpop.f32.mrb[0].mxu0
        %432 = vmatprep.mubr.f32.mxu0 0.0
        %433 = vmatmul.mubr.f32.gmra.mrb[0].mxu0 %v343
        %v434 = vpop.f32.mrb[0].mxu0
        %v435 = vadd.f32 %v336, %v434
        %v436 = vpop.f32.mrb[0].mxu0
        %437 = vmatprep.mubr.f32.mxu0 0.0
        %438 = vmatmul.mubr.f32.gmra.mrb[0].mxu0 %v346
        %v439 = vpop.f32.mrb[0].mxu0
        %v440 = vadd.f32 %v336, %v439
        %v441 = vpop.f32.mrb[0].mxu0
        %442 = vmatprep.mubr.f32.mxu0 0.0
        %443 = vmatmul.mubr.f32.gmra.mrb[0].mxu0 %v349
        %v444 = vpop.f32.mrb[0].mxu0
        %v445 = vadd.f32 %v336, %v444
        %v446 = vpop.f32.mrb[0].mxu0
        %447 = vmatprep.mubr.f32.mxu0 0.0
        %448 = vmatmul.mubr.f32.gmra.mrb[0].mxu0 %v352
        %v449 = vpop.f32.mrb[0].mxu0
        %v450 = vadd.f32 %v336, %v449
        %v451 = vpop.f32.mrb[0].mxu0
        %452 = vmatprep.mubr.f32.mxu0 0.0
        %453 = vmatmul.mubr.f32.gmra.mrb[0].mxu0 %v355
        %v454 = vpop.f32.mrb[0].mxu0
        %v455 = vadd.f32 %v336, %v454
        %v456 = vpop.f32.mrb[0].mxu0
        %457 = vmatprep.mubr.f32.mxu0 0.0
        %458 = vmatmul.mubr.f32.gmra.mrb[0].mxu0 %v358
        %v459 = vpop.f32.mrb[0].mxu0
        %v460 = vadd.f32 %v336, %v459
        %v461 = vpop.f32.mrb[0].mxu0
        %462 = vmatprep.mubr.f32.mxu0 0.0
        %463 = vmatmul.mubr.f32.gmra.mrb[0].mxu0 %v361
        %v464 = vpop.f32.mrb[0].mxu0
        %v465 = vadd.f32 %v336, %v464
        %v466 = vpop.f32.mrb[0].mxu0
        %467 = vdwg.mxu0
        %v468 = vmul.f32 %v430, %v430
        %v469 = vmul.f32 %v435, %v435
        %v470 = vmul.f32 %v440, %v440
        %v471 = vmul.f32 %v445, %v445
        %v472 = vmul.f32 %v450, %v450
        %v473 = vmul.f32 %v455, %v455
        %v474 = vmul.f32 %v460, %v460
        %v475 = vmul.f32 %v465, %v465
        %v476 = vld [vmem:[%s5] sm:$0xff]
        %v477 = vld [vmem:[%s5 + $0x8] sm:$0xff]
        %v478 = vld [vmem:[%s5 + $0x10] sm:$0xff]
        %v479 = vld [vmem:[%s5 + $0x18] sm:$0xff]
        %v481 = vsel %vm338, %v468, 0
        %v484 = vsel %vm338, %v469, 0
        %v487 = vsel %vm338, %v470, 0
        %v490 = vsel %vm338, %v471, 0
        %v493 = vsel %vm338, %v472, 0
        %v496 = vsel %vm338, %v473, 0
        %v499 = vsel %vm338, %v474, 0
        %v502 = vsel %vm338, %v475, 0
        %504 = vmatprep.subr.mxu0 0.0
        %505 = vmatpush1.msra.mxu0 %v476
        %506 = vmatprep.subr.mxu0 0.0
        %507 = vmatpush1.msra.mxu0 %v477
        %508 = vmatprep.subr.mxu0 0.0
        %509 = vmatpush1.msra.mxu0 %v478
        %510 = vmatprep.subr.mxu0 0.0
        %511 = vmatpush1.msra.mxu0 %v479
        %512 = vmatprep.subr.mxu0 0.0
        %513 = vmatpush1.msra.mxu0 0.0
        %514 = vmatprep.subr.mxu0 0.0
        %515 = vmatpush1.msra.mxu0 0.0
        %516 = vmatprep.subr.mxu0 0.0
        %517 = vmatpush1.msra.mxu0 0.0
        %518 = vmatprep.subr.mxu0 0.0
        %519 = vmatpush1.msra.mxu0 0.0
        %520 = vmatprep.subr.mxu0 0.0
        %521 = vmatpush1.msra.mxu0 0.0
        %522 = vmatprep.subr.mxu0 0.0
        %523 = vmatpush1.msra.mxu0 0.0
        %524 = vmatprep.subr.mxu0 0.0
        %525 = vmatpush1.msra.mxu0 0.0
        %526 = vmatprep.subr.mxu0 0.0
        %527 = vmatpush1.msra.mxu0 0.0
        %528 = vmatprep.subr.mxu0 0.0
        %529 = vmatpush1.msra.mxu0 0.0
        %530 = vmatprep.subr.mxu0 0.0
        %531 = vmatpush1.msra.mxu0 0.0
        %532 = vmatprep.subr.mxu0 0.0
        %533 = vmatpush1.msra.mxu0 0.0
        %534 = vmatprep.subr.mxu0 0.0
        %535 = vmatpush1.msra.mxu0 0.0
        %536 = vmatprep.subr.mxu0 0.0
        %537 = vmatpush1.msra.mxu0 0.0
        %538 = vmatprep.subr.mxu0 0.0
        %539 = vmatpush1.msra.mxu0 0.0
        %540 = vmatprep.subr.mxu0 0.0
        %541 = vmatpush1.msra.mxu0 0.0
        %542 = vmatprep.subr.mxu0 0.0
        %543 = vmatpush1.msra.mxu0 0.0
        %544 = vmatprep.subr.mxu0 0.0
        %545 = vmatpush1.msra.mxu0 0.0
        %546 = vmatprep.subr.mxu0 0.0
        %547 = vmatpush1.msra.mxu0 0.0
        %548 = vmatprep.subr.mxu0 0.0
        %549 = vmatpush1.msra.mxu0 0.0
        %550 = vmatprep.subr.mxu0 0.0
        %551 = vmatpush1.msra.mxu0 0.0
        %552 = vmatprep.subr.mxu0 0.0
        %553 = vmatpush1.msra.mxu0 0.0
        %554 = vmatprep.subr.mxu0 0.0
        %555 = vmatpush1.msra.mxu0 0.0
        %556 = vmatprep.subr.mxu0 0.0
        %557 = vmatpush1.msra.mxu0 0.0
        %558 = vmatprep.subr.mxu0 0.0
        %559 = vmatpush1.msra.mxu0 0.0
        %560 = vmatprep.subr.mxu0 0.0
        %561 = vmatpush1.msra.mxu0 0.0
        %562 = vmatprep.subr.mxu0 0.0
        %563 = vmatpush1.msra.mxu0 0.0
        %564 = vmatprep.subr.mxu0 0.0
        %565 = vmatpush1.msra.mxu0 0.0
        %566 = vmatprep.subr.mxu0 0.0
        %567 = vmatpush1.msra.mxu0 0.0
        %568 = vmatprep.mubr.f32.mxu0 0.0
        %569 = vmatmul.mubr.f32.gmra.mrb[0].mxu0 %v481
        %v570 = vpop.f32.mrb[0].mxu0
        %v571 = vadd.f32 0.0, %v570
        %v572 = vpop.f32.mrb[0].mxu0
        %573 = vmatprep.mubr.f32.mxu0 0.0
        %574 = vmatmul.mubr.f32.gmra.mrb[0].mxu0 %v484
        %v575 = vpop.f32.mrb[0].mxu0
        %v576 = vadd.f32 0.0, %v575
        %v577 = vpop.f32.mrb[0].mxu0
        %578 = vmatprep.mubr.f32.mxu0 0.0
        %579 = vmatmul.mubr.f32.gmra.mrb[0].mxu0 %v487
        %v580 = vpop.f32.mrb[0].mxu0
        %v581 = vadd.f32 0.0, %v580
        %v582 = vpop.f32.mrb[0].mxu0
        %583 = vmatprep.mubr.f32.mxu0 0.0
        %584 = vmatmul.mubr.f32.gmra.mrb[0].mxu0 %v490
        %v585 = vpop.f32.mrb[0].mxu0
        %v586 = vadd.f32 0.0, %v585
        %v587 = vpop.f32.mrb[0].mxu0
        %588 = vmatprep.mubr.f32.mxu0 0.0
        %589 = vmatmul.mubr.f32.gmra.mrb[0].mxu0 %v493
        %v590 = vpop.f32.mrb[0].mxu0
        %v591 = vadd.f32 0.0, %v590
        %v592 = vpop.f32.mrb[0].mxu0
        %593 = vmatprep.mubr.f32.mxu0 0.0
        %594 = vmatmul.mubr.f32.gmra.mrb[0].mxu0 %v496
        %v595 = vpop.f32.mrb[0].mxu0
        %v596 = vadd.f32 0.0, %v595
        %v597 = vpop.f32.mrb[0].mxu0
        %598 = vmatprep.mubr.f32.mxu0 0.0
        %599 = vmatmul.mubr.f32.gmra.mrb[0].mxu0 %v499
        %v600 = vpop.f32.mrb[0].mxu0
        %v601 = vadd.f32 0.0, %v600
        %v602 = vpop.f32.mrb[0].mxu0
        %603 = vmatprep.mubr.f32.mxu0 0.0
        %604 = vmatmul.mubr.f32.gmra.mrb[0].mxu0 %v502
        %v605 = vpop.f32.mrb[0].mxu0
        %v606 = vadd.f32 0.0, %v605
        %v607 = vpop.f32.mrb[0].mxu0
        %608 = vdwg.mxu0
        %v609 = vmul.f32 %v571, 0.17677669
        %v610 = vmul.f32 %v576, 0.17677669
        %v611 = vmul.f32 %v581, 0.17677669
        %v612 = vmul.f32 %v586, 0.17677669
        %v613 = vmul.f32 %v591, 0.17677669
        %v614 = vmul.f32 %v596, 0.17677669
        %v615 = vmul.f32 %v601, 0.17677669
        %v616 = vmul.f32 %v606, 0.17677669
        %vm617 = vcmask 1048064
        %v618 = vsel %vm617, %v430, -inf
        %619 = vmax.xlane.f32.xlu0 %v618
        %v620 = vpop.xlane.xlu0 %619
        %v621 = vsel %vm617, %v435, -inf
        %622 = vmax.xlane.f32.xlu0 %v621
        %v623 = vpop.xlane.xlu0 %622
        %v624 = vsel %vm617, %v440, -inf
        %625 = vmax.xlane.f32.xlu0 %v624
        %v626 = vpop.xlane.xlu0 %625
        %v627 = vsel %vm617, %v445, -inf
        %628 = vmax.xlane.f32.xlu0 %v627
        %v629 = vpop.xlane.xlu0 %628
        %v630 = vsel %vm617, %v450, -inf
        %631 = vmax.xlane.f32.xlu0 %v630
        %v632 = vpop.xlane.xlu0 %631
        %v633 = vsel %vm617, %v455, -inf
        %634 = vmax.xlane.f32.xlu0 %v633
        %v635 = vpop.xlane.xlu0 %634
        %v636 = vsel %vm617, %v460, -inf
        %637 = vmax.xlane.f32.xlu0 %v636
        %v638 = vpop.xlane.xlu0 %637
        %v639 = vsel %vm617, %v465, -inf
        %640 = vmax.xlane.f32.xlu0 %v639
        %v641 = vpop.xlane.xlu0 %640
        %650 = vrot.lane.b32.xlu0 %v609, 64
        %v651 = vpop.permute.xlu0 %650
        %652 = vrot.lane.b32.xlu0 %v610, 64
        %v653 = vpop.permute.xlu0 %652
        %654 = vrot.lane.b32.xlu0 %v611, 64
        %v655 = vpop.permute.xlu0 %654
        %656 = vrot.lane.b32.xlu0 %v612, 64
        %v657 = vpop.permute.xlu0 %656
        %658 = vrot.lane.b32.xlu0 %v613, 64
        %v659 = vpop.permute.xlu0 %658
        %660 = vrot.lane.b32.xlu0 %v614, 64
        %v661 = vpop.permute.xlu0 %660
        %662 = vrot.lane.b32.xlu0 %v615, 64
        %v663 = vpop.permute.xlu0 %662
        %664 = vrot.lane.b32.xlu0 %v616, 64
        %v665 = vpop.permute.xlu0 %664
        %v674 = vsub.f32 %v430, %v651
        %v675 = vsub.f32 %v435, %v653
        %v676 = vsub.f32 %v440, %v655
        %v677 = vsub.f32 %v445, %v657
        %v678 = vsub.f32 %v450, %v659
        %v679 = vsub.f32 %v455, %v661
        %v680 = vsub.f32 %v460, %v663
        %v681 = vsub.f32 %v465, %v665
        %v682 = vsub.f32 %v674, %v620
        %v683 = vsub.f32 %v675, %v623
        %v684 = vsub.f32 %v676, %v626
        %v685 = vsub.f32 %v677, %v629
        %v686 = vsub.f32 %v678, %v632
        %v687 = vsub.f32 %v679, %v635
        %v688 = vsub.f32 %v680, %v638
        %v689 = vsub.f32 %v681, %v641
        %v690 = vmul.f32 %v682, 1.442695
        %v691 = vpow.pop %v690
        %v692 = vmul.f32 %v683, 1.442695
        %v693 = vpow.pop %v692
        %v694 = vmul.f32 %v684, 1.442695
        %v695 = vpow.pop %v694
        %v696 = vmul.f32 %v685, 1.442695
        %v697 = vpow.pop %v696
        %v698 = vmul.f32 %v686, 1.442695
        %v699 = vpow.pop %v698
        %v700 = vmul.f32 %v687, 1.442695
        %v701 = vpow.pop %v700
        %v702 = vmul.f32 %v688, 1.442695
        %v703 = vpow.pop %v702
        %v704 = vmul.f32 %v689, 1.442695
        %v705 = vpow.pop %v704
        %v706 = vadd.f32 %v691, 0.0001
        %v707 = vadd.f32 %v693, 0.0001
        %v708 = vadd.f32 %v695, 0.0001
        %v709 = vadd.f32 %v697, 0.0001
        %v710 = vadd.f32 %v699, 0.0001
        %v711 = vadd.f32 %v701, 0.0001
        %v712 = vadd.f32 %v703, 0.0001
        %v713 = vadd.f32 %v705, 0.0001
        %v714 = vld [vmem:[#allocation2] sm:$0xff]
        %v715 = vld [vmem:[#allocation2 + $0x8] sm:$0xff]
        %v716 = vld [vmem:[#allocation2 + $0x10] sm:$0xff]
        %v717 = vld [vmem:[#allocation2 + $0x18] sm:$0xff]
        %v718 = vld [vmem:[#allocation2 + $0x20] sm:$0xff]
        %v719 = vld [vmem:[#allocation2 + $0x28] sm:$0xff]
        %v720 = vld [vmem:[#allocation2 + $0x30] sm:$0xff]
        %v721 = vld [vmem:[#allocation2 + $0x38] sm:$0xff]
        %730 = vrot.lane.b32.xlu0 %v706, 64
        %v731 = vpop.permute.xlu0 %730
        %732 = vrot.lane.b32.xlu0 %v707, 64
        %v733 = vpop.permute.xlu0 %732
        %734 = vrot.lane.b32.xlu0 %v708, 64
        %v735 = vpop.permute.xlu0 %734
        %736 = vrot.lane.b32.xlu0 %v709, 64
        %v737 = vpop.permute.xlu0 %736
        %738 = vrot.lane.b32.xlu0 %v710, 64
        %v739 = vpop.permute.xlu0 %738
        %740 = vrot.lane.b32.xlu0 %v711, 64
        %v741 = vpop.permute.xlu0 %740
        %742 = vrot.lane.b32.xlu0 %v712, 64
        %v743 = vpop.permute.xlu0 %742
        %744 = vrot.lane.b32.xlu0 %v713, 64
        %v745 = vpop.permute.xlu0 %744
        %754 = vxpose.xlu0.b32.start [1/16] %v731, 128
        %755 = vxpose.xlu0.b32.cont [2/16] %v733, 128
        %756 = vxpose.xlu0.b32.cont [3/16] %v735, 128
        %757 = vxpose.xlu0.b32.cont [4/16] %v737, 128
        %758 = vxpose.xlu0.b32.cont [5/16] %v739, 128
        %759 = vxpose.xlu0.b32.cont [6/16] %v741, 128
        %760 = vxpose.xlu0.b32.cont [7/16] %v743, 128
        %761 = vxpose.xlu0.b32.cont [8/16] %v745, 128
        %762 = vxpose.xlu0.b32.cont [9/16] 0.0, 128
        %763 = vxpose.xlu0.b32.cont [10/16] 0.0, 128
        %764 = vxpose.xlu0.b32.cont [11/16] 0.0, 128
        %765 = vxpose.xlu0.b32.cont [12/16] 0.0, 128
        %766 = vxpose.xlu0.b32.cont [13/16] 0.0, 128
        %767 = vxpose.xlu0.b32.cont [14/16] 0.0, 128
        %768 = vxpose.xlu0.b32.cont [15/16] 0.0, 128
        %769 = vxpose.xlu0.b32.end [16/16] 0.0, 128
        %v770 = vpop.trf.xlu0
        %v771 = vpop.trf.xlu0
        %v772 = vpop.trf.xlu0
        %v773 = vpop.trf.xlu0
        %v774 = vpop.trf.xlu0
        %v775 = vpop.trf.xlu0
        %v776 = vpop.trf.xlu0
        %v777 = vpop.trf.xlu0
        %v778 = vpop.trf.xlu0
        %v779 = vpop.trf.xlu0
        %v780 = vpop.trf.xlu0
        %v781 = vpop.trf.xlu0
        %v782 = vpop.trf.xlu0
        %v783 = vpop.trf.xlu0
        %v784 = vpop.trf.xlu0
        %v785 = vpop.trf.xlu0
        %794 = vrot.lane.b32.xlu0 %v430, 96
        %v795 = vpop.permute.xlu0 %794
        %796 = vrot.lane.b32.xlu0 %v435, 96
        %v797 = vpop.permute.xlu0 %796
        %798 = vrot.lane.b32.xlu0 %v440, 96
        %v799 = vpop.permute.xlu0 %798
        %800 = vrot.lane.b32.xlu0 %v445, 96
        %v801 = vpop.permute.xlu0 %800
        %802 = vrot.lane.b32.xlu0 %v450, 96
        %v803 = vpop.permute.xlu0 %802
        %804 = vrot.lane.b32.xlu0 %v455, 96
        %v805 = vpop.permute.xlu0 %804
        %806 = vrot.lane.b32.xlu0 %v460, 96
        %v807 = vpop.permute.xlu0 %806
        %808 = vrot.lane.b32.xlu0 %v465, 96
        %v809 = vpop.permute.xlu0 %808
        %vm818 = vcmask 523264
        %v820 = vsel %vm818, %v770, 0
        %v823 = vsel %vm818, %v771, 0
        %v826 = vsel %vm818, %v772, 0
        %v829 = vsel %vm818, %v773, 0
        %v832 = vsel %vm818, %v774, 0
        %v835 = vsel %vm818, %v775, 0
        %v838 = vsel %vm818, %v776, 0
        %v841 = vsel %vm818, %v777, 0
        %843 = vmatprep.subr.mxu0 0.0
        %844 = vmatpush1.msra.mxu0 %v795
        %845 = vmatprep.subr.mxu0 0.0
        %846 = vmatpush1.msra.mxu0 %v797
        %847 = vmatprep.subr.mxu0 0.0
        %848 = vmatpush1.msra.mxu0 %v799
        %849 = vmatprep.subr.mxu0 0.0
        %850 = vmatpush1.msra.mxu0 %v801
        %851 = vmatprep.subr.mxu0 0.0
        %852 = vmatpush1.msra.mxu0 %v803
        %853 = vmatprep.subr.mxu0 0.0
        %854 = vmatpush1.msra.mxu0 %v805
        %855 = vmatprep.subr.mxu0 0.0
        %856 = vmatpush1.msra.mxu0 %v807
        %857 = vmatprep.subr.mxu0 0.0
        %858 = vmatpush1.msra.mxu0 %v809
        %859 = vmatprep.subr.mxu0 0.0
        %860 = vmatpush1.msra.mxu0 0.0
        %861 = vmatprep.subr.mxu0 0.0
        %862 = vmatpush1.msra.mxu0 0.0
        %863 = vmatprep.subr.mxu0 0.0
        %864 = vmatpush1.msra.mxu0 0.0
        %865 = vmatprep.subr.mxu0 0.0
        %866 = vmatpush1.msra.mxu0 0.0
        %867 = vmatprep.subr.mxu0 0.0
        %868 = vmatpush1.msra.mxu0 0.0
        %869 = vmatprep.subr.mxu0 0.0
        %870 = vmatpush1.msra.mxu0 0.0
        %871 = vmatprep.subr.mxu0 0.0
        %872 = vmatpush1.msra.mxu0 0.0
        %873 = vmatprep.subr.mxu0 0.0
        %874 = vmatpush1.msra.mxu0 0.0
        %875 = vmatprep.subr.mxu0 0.0
        %876 = vmatpush1.msra.mxu0 0.0
        %877 = vmatprep.subr.mxu0 0.0
        %878 = vmatpush1.msra.mxu0 0.0
        %879 = vmatprep.subr.mxu0 0.0
        %880 = vmatpush1.msra.mxu0 0.0
        %881 = vmatprep.subr.mxu0 0.0
        %882 = vmatpush1.msra.mxu0 0.0
        %883 = vmatprep.subr.mxu0 0.0
        %884 = vmatpush1.msra.mxu0 0.0
        %885 = vmatprep.subr.mxu0 0.0
        %886 = vmatpush1.msra.mxu0 0.0
        %887 = vmatprep.subr.mxu0 0.0
        %888 = vmatpush1.msra.mxu0 0.0
        %889 = vmatprep.subr.mxu0 0.0
        %890 = vmatpush1.msra.mxu0 0.0
        %891 = vmatprep.subr.mxu0 0.0
        %892 = vmatpush1.msra.mxu0 0.0
        %893 = vmatprep.subr.mxu0 0.0
        %894 = vmatpush1.msra.mxu0 0.0
        %895 = vmatprep.subr.mxu0 0.0
        %896 = vmatpush1.msra.mxu0 0.0
        %897 = vmatprep.subr.mxu0 0.0
        %898 = vmatpush1.msra.mxu0 0.0
        %899 = vmatprep.subr.mxu0 0.0
        %900 = vmatpush1.msra.mxu0 0.0
        %901 = vmatprep.subr.mxu0 0.0
        %902 = vmatpush1.msra.mxu0 0.0
        %903 = vmatprep.subr.mxu0 0.0
        %904 = vmatpush1.msra.mxu0 0.0
        %905 = vmatprep.subr.mxu0 0.0
        %906 = vmatpush1.msra.mxu0 0.0
        %907 = vmatprep.mubr.f32.mxu0 0.0
        %908 = vmatmul.mubr.f32.gmra.mrb[0].mxu0 %v820
        %v909 = vpop.f32.mrb[0].mxu0
        %v910 = vadd.f32 0.0, %v909
        %v911 = vpop.f32.mrb[0].mxu0
        %912 = vmatprep.mubr.f32.mxu0 0.0
        %913 = vmatmul.mubr.f32.gmra.mrb[0].mxu0 %v823
        %v914 = vpop.f32.mrb[0].mxu0
        %v915 = vadd.f32 0.0, %v914
        %v916 = vpop.f32.mrb[0].mxu0
        %917 = vmatprep.mubr.f32.mxu0 0.0
        %918 = vmatmul.mubr.f32.gmra.mrb[0].mxu0 %v826
        %v919 = vpop.f32.mrb[0].mxu0
        %v920 = vadd.f32 0.0, %v919
        %v921 = vpop.f32.mrb[0].mxu0
        %922 = vmatprep.mubr.f32.mxu0 0.0
        %923 = vmatmul.mubr.f32.gmra.mrb[0].mxu0 %v829
        %v924 = vpop.f32.mrb[0].mxu0
        %v925 = vadd.f32 0.0, %v924
        %v926 = vpop.f32.mrb[0].mxu0
        %927 = vmatprep.mubr.f32.mxu0 0.0
        %928 = vmatmul.mubr.f32.gmra.mrb[0].mxu0 %v832
        %v929 = vpop.f32.mrb[0].mxu0
        %v930 = vadd.f32 0.0, %v929
        %v931 = vpop.f32.mrb[0].mxu0
        %932 = vmatprep.mubr.f32.mxu0 0.0
        %933 = vmatmul.mubr.f32.gmra.mrb[0].mxu0 %v835
        %v934 = vpop.f32.mrb[0].mxu0
        %v935 = vadd.f32 0.0, %v934
        %v936 = vpop.f32.mrb[0].mxu0
        %937 = vmatprep.mubr.f32.mxu0 0.0
        %938 = vmatmul.mubr.f32.gmra.mrb[0].mxu0 %v838
        %v939 = vpop.f32.mrb[0].mxu0
        %v940 = vadd.f32 0.0, %v939
        %v941 = vpop.f32.mrb[0].mxu0
        %942 = vmatprep.mubr.f32.mxu0 0.0
        %943 = vmatmul.mubr.f32.gmra.mrb[0].mxu0 %v841
        %v944 = vpop.f32.mrb[0].mxu0
        %v945 = vadd.f32 0.0, %v944
        %v946 = vpop.f32.mrb[0].mxu0
        %947 = vdwg.mxu0
        %v948 = vadd.f32 %v714, %v910
        %v949 = vadd.f32 %v715, %v915
        %v950 = vadd.f32 %v716, %v920
        %v951 = vadd.f32 %v717, %v925
        %v952 = vadd.f32 %v718, %v930
        %v953 = vadd.f32 %v719, %v935
        %v954 = vadd.f32 %v720, %v940
        %v955 = vadd.f32 %v721, %v945
        %956 = vst.msk [vmem:[#allocation2] sm:$0xff] %vm338, %v948
        %957 = vst.msk [vmem:[#allocation2 + $0x8] sm:$0xff] %vm338, %v949
        %958 = vst.msk [vmem:[#allocation2 + $0x10] sm:$0xff] %vm338, %v950
        %959 = vst.msk [vmem:[#allocation2 + $0x18] sm:$0xff] %vm338, %v951
        %960 = vst.msk [vmem:[#allocation2 + $0x20] sm:$0xff] %vm338, %v952
        %961 = vst.msk [vmem:[#allocation2 + $0x28] sm:$0xff] %vm338, %v953
        %962 = vst.msk [vmem:[#allocation2 + $0x30] sm:$0xff] %vm338, %v954
        %963 = vst.msk [vmem:[#allocation2 + $0x38] sm:$0xff] %vm338, %v955
        %v964 = vld [vmem:[#allocation3] sm:$0x1]
        %v965 = vsel %vm617, %v706, 0.0
        %v966 = vsel %vm617, %v707, 0.0
        %v967 = vadd.f32 %v965, %v966
        %v968 = vsel %vm617, %v708, 0.0
        %v969 = vadd.f32 %v967, %v968
        %v970 = vsel %vm617, %v709, 0.0
        %v971 = vadd.f32 %v969, %v970
        %v972 = vsel %vm617, %v710, 0.0
        %v973 = vadd.f32 %v971, %v972
        %v974 = vsel %vm617, %v711, 0.0
        %v975 = vadd.f32 %v973, %v974
        %v976 = vsel %vm617, %v712, 0.0
        %v977 = vadd.f32 %v975, %v976
        %v978 = vsel %vm617, %v713, 0.0
        %v979 = vadd.f32 %v977, %v978
        %v980 = vrot.slane %v979, 4
        %v981 = vadd.f32 %v979, %v980
        %v982 = vrot.slane %v981, 2
        %v983 = vadd.f32 %v981, %v982
        %v984 = vrot.slane %v983, 1
        %v985 = vadd.f32 %v983, %v984
        %v988 = vunpack.c.l.s4 1966171168
        %v989 = vunpack.c.0.s8 %v988
        %v990 = vlaneseq
        %v991 = vshrl.u32 %v990, 7
        %v992 = vsub.s32 %v989, %v991
        %v993 = vrot.slane %v985, %v992
        %v995 = vunpack.c.l.s4 1966171168
        %v996 = vunpack.c.0.s8 %v995
        %v997 = vlaneseq
        %v998 = vshrl.u32 %v997, 7
        %v999 = vsub.s32 %v996, %v998
        %v1000 = vrot.slane %v993, %v999
        %1001 = vrot.lane.b32.xlu0 %v1000, 64
        %v1002 = vpop.permute.xlu0 %1001
        %v1004 = vadd.f32 %v964, %v1002
        %vm1005 = vcmask 516096
        %1006 = vst.msk [vmem:[#allocation3] sm:$0x1] %vm1005, %v1004
      $region56: #{tpu_custom_call.1} parent=47 // pred_fallthru
        _
      // Predicated region
      $region57: #{tpu_custom_call.1} parent=47 // pred_check
        _
      $region58: #{tpu_custom_call.1} parent=47 // pred_check_branch
        %1008 = sbr.rel (%p301) target = $region60
      $region59: #{tpu_custom_call.1} parent=47 // pred_region
        %v1009 = vld [vmem:[#allocation2] sm:$0xff]
        %v1010 = vld [vmem:[#allocation2 + $0x8] sm:$0xff]
        %v1011 = vld [vmem:[#allocation2 + $0x10] sm:$0xff]
        %v1012 = vld [vmem:[#allocation2 + $0x18] sm:$0xff]
        %v1013 = vld [vmem:[#allocation2 + $0x20] sm:$0xff]
        %v1014 = vld [vmem:[#allocation2 + $0x28] sm:$0xff]
        %v1015 = vld [vmem:[#allocation2 + $0x30] sm:$0xff]
        %v1016 = vld [vmem:[#allocation2 + $0x38] sm:$0xff]
        %v1017 = vld [vmem:[%s6] sm:$0xff]
        %v1018 = vld [vmem:[%s6 + $0x8] sm:$0xff]
        %v1019 = vld [vmem:[%s6 + $0x10] sm:$0xff]
        %v1020 = vld [vmem:[%s6 + $0x18] sm:$0xff]
        %v1021 = vld [vmem:[%s6 + $0x20] sm:$0xff]
        %v1022 = vld [vmem:[%s6 + $0x28] sm:$0xff]
        %v1023 = vld [vmem:[%s6 + $0x30] sm:$0xff]
        %v1024 = vld [vmem:[%s6 + $0x38] sm:$0xff]
        %v1025 = vmul.f32 %v1009, %v1017
        %v1026 = vmul.f32 %v1010, %v1018
        %v1027 = vmul.f32 %v1011, %v1019
        %v1028 = vmul.f32 %v1012, %v1020
        %v1029 = vmul.f32 %v1013, %v1021
        %v1030 = vmul.f32 %v1014, %v1022
        %v1031 = vmul.f32 %v1015, %v1023
        %v1032 = vmul.f32 %v1016, %v1024
        %vm1033 = vcmask 261120
        %1034 = vst.msk [vmem:[#allocation2] sm:$0xff] %vm1033, %v1025
        %1035 = vst.msk [vmem:[#allocation2 + $0x8] sm:$0xff] %vm1033, %v1026
        %1036 = vst.msk [vmem:[#allocation2 + $0x10] sm:$0xff] %vm1033, %v1027
        %1037 = vst.msk [vmem:[#allocation2 + $0x18] sm:$0xff] %vm1033, %v1028
        %1038 = vst.msk [vmem:[#allocation2 + $0x20] sm:$0xff] %vm1033, %v1029
        %1039 = vst.msk [vmem:[#allocation2 + $0x28] sm:$0xff] %vm1033, %v1030
        %1040 = vst.msk [vmem:[#allocation2 + $0x30] sm:$0xff] %vm1033, %v1031
        %1041 = vst.msk [vmem:[#allocation2 + $0x38] sm:$0xff] %vm1033, %v1032
      $region60: #{tpu_custom_call.1} parent=47 // pred_fallthru
        _
      %p1042 = scmp.eq.s32.totalorder %s22, 1
      // Predicated region
      $region61: #{tpu_custom_call.1} parent=47 // pred_check
        %p1043 = pneg %p1042
      $region62: #{tpu_custom_call.1} parent=47 // pred_check_branch
        %1045 = sbr.rel (%p1043) target = $region64
      $region63: #{tpu_custom_call.1} parent=47 // pred_region
        %v1046 = vld [vmem:[%s3] sm:$0xff]
        %v1047 = vld [vmem:[%s3 + $0x8] sm:$0xff]
        %v1048 = vld [vmem:[%s3 + $0x10] sm:$0xff]
        %v1049 = vld [vmem:[%s3 + $0x18] sm:$0xff]
        %v1050 = vld [vmem:[%s4] sm:$0x1]
        %v1052 = vlaneseq
        %v1053 = vshrl.u32 %v1052, 7
        %v1054 = vsub.s32 0, %v1053
        %v1055 = vrot.slane %v1050, %v1054
        %vm1057 = vcmask 261120
        %v1059 = vsel %vm1057, %v316, 0
        %v1062 = vsel %vm1057, %v317, 0
        %v1065 = vsel %vm1057, %v318, 0
        %v1068 = vsel %vm1057, %v319, 0
        %v1071 = vsel %vm1057, %v320, 0
        %v1074 = vsel %vm1057, %v321, 0
        %v1077 = vsel %vm1057, %v322, 0
        %v1080 = vsel %vm1057, %v323, 0
        %1082 = vmatprep.subr.mxu0 0.0
        %1083 = vmatpush1.msra.mxu0 %v1046
        %1084 = vmatprep.subr.mxu0 0.0
        %1085 = vmatpush1.msra.mxu0 %v1047
        %1086 = vmatprep.subr.mxu0 0.0
        %1087 = vmatpush1.msra.mxu0 %v1048
        %1088 = vmatprep.subr.mxu0 0.0
        %1089 = vmatpush1.msra.mxu0 %v1049
        %1090 = vmatprep.subr.mxu0 0.0
        %1091 = vmatpush1.msra.mxu0 0.0
        %1092 = vmatprep.subr.mxu0 0.0
        %1093 = vmatpush1.msra.mxu0 0.0
        %1094 = vmatprep.subr.mxu0 0.0
        %1095 = vmatpush1.msra.mxu0 0.0
        %1096 = vmatprep.subr.mxu0 0.0
        %1097 = vmatpush1.msra.mxu0 0.0
        %1098 = vmatprep.subr.mxu0 0.0
        %1099 = vmatpush1.msra.mxu0 0.0
        %1100 = vmatprep.subr.mxu0 0.0
        %1101 = vmatpush1.msra.mxu0 0.0
        %1102 = vmatprep.subr.mxu0 0.0
        %1103 = vmatpush1.msra.mxu0 0.0
        %1104 = vmatprep.subr.mxu0 0.0
        %1105 = vmatpush1.msra.mxu0 0.0
        %1106 = vmatprep.subr.mxu0 0.0
        %1107 = vmatpush1.msra.mxu0 0.0
        %1108 = vmatprep.subr.mxu0 0.0
        %1109 = vmatpush1.msra.mxu0 0.0
        %1110 = vmatprep.subr.mxu0 0.0
        %1111 = vmatpush1.msra.mxu0 0.0
        %1112 = vmatprep.subr.mxu0 0.0
        %1113 = vmatpush1.msra.mxu0 0.0
        %1114 = vmatprep.subr.mxu0 0.0
        %1115 = vmatpush1.msra.mxu0 0.0
        %1116 = vmatprep.subr.mxu0 0.0
        %1117 = vmatpush1.msra.mxu0 0.0
        %1118 = vmatprep.subr.mxu0 0.0
        %1119 = vmatpush1.msra.mxu0 0.0
        %1120 = vmatprep.subr.mxu0 0.0
        %1121 = vmatpush1.msra.mxu0 0.0
        %1122 = vmatprep.subr.mxu0 0.0
        %1123 = vmatpush1.msra.mxu0 0.0
        %1124 = vmatprep.subr.mxu0 0.0
        %1125 = vmatpush1.msra.mxu0 0.0
        %1126 = vmatprep.subr.mxu0 0.0
        %1127 = vmatpush1.msra.mxu0 0.0
        %1128 = vmatprep.subr.mxu0 0.0
        %1129 = vmatpush1.msra.mxu0 0.0
        %1130 = vmatprep.subr.mxu0 0.0
        %1131 = vmatpush1.msra.mxu0 0.0
        %1132 = vmatprep.subr.mxu0 0.0
        %1133 = vmatpush1.msra.mxu0 0.0
        %1134 = vmatprep.subr.mxu0 0.0
        %1135 = vmatpush1.msra.mxu0 0.0
        %1136 = vmatprep.subr.mxu0 0.0
        %1137 = vmatpush1.msra.mxu0 0.0
        %1138 = vmatprep.subr.mxu0 0.0
        %1139 = vmatpush1.msra.mxu0 0.0
        %1140 = vmatprep.subr.mxu0 0.0
        %1141 = vmatpush1.msra.mxu0 0.0
        %1142 = vmatprep.subr.mxu0 0.0
        %1143 = vmatpush1.msra.mxu0 0.0
        %1144 = vmatprep.subr.mxu0 0.0
        %1145 = vmatpush1.msra.mxu0 0.0
        %1146 = vmatprep.mubr.f32.mxu0 0.0
        %1147 = vmatmul.mubr.f32.gmra.mrb[0].mxu0 %v1059
        %v1148 = vpop.f32.mrb[0].mxu0
        %v1149 = vadd.f32 %v1055, %v1148
        %v1150 = vpop.f32.mrb[0].mxu0
        %1151 = vmatprep.mubr.f32.mxu0 0.0
        %1152 = vmatmul.mubr.f32.gmra.mrb[0].mxu0 %v1062
        %v1153 = vpop.f32.mrb[0].mxu0
        %v1154 = vadd.f32 %v1055, %v1153
        %v1155 = vpop.f32.mrb[0].mxu0
        %1156 = vmatprep.mubr.f32.mxu0 0.0
        %1157 = vmatmul.mubr.f32.gmra.mrb[0].mxu0 %v1065
        %v1158 = vpop.f32.mrb[0].mxu0
        %v1159 = vadd.f32 %v1055, %v1158
        %v1160 = vpop.f32.mrb[0].mxu0
        %1161 = vmatprep.mubr.f32.mxu0 0.0
        %1162 = vmatmul.mubr.f32.gmra.mrb[0].mxu0 %v1068
        %v1163 = vpop.f32.mrb[0].mxu0
        %v1164 = vadd.f32 %v1055, %v1163
        %v1165 = vpop.f32.mrb[0].mxu0
        %1166 = vmatprep.mubr.f32.mxu0 0.0
        %1167 = vmatmul.mubr.f32.gmra.mrb[0].mxu0 %v1071
        %v1168 = vpop.f32.mrb[0].mxu0
        %v1169 = vadd.f32 %v1055, %v1168
        %v1170 = vpop.f32.mrb[0].mxu0
        %1171 = vmatprep.mubr.f32.mxu0 0.0
        %1172 = vmatmul.mubr.f32.gmra.mrb[0].mxu0 %v1074
        %v1173 = vpop.f32.mrb[0].mxu0
        %v1174 = vadd.f32 %v1055, %v1173
        %v1175 = vpop.f32.mrb[0].mxu0
        %1176 = vmatprep.mubr.f32.mxu0 0.0
        %1177 = vmatmul.mubr.f32.gmra.mrb[0].mxu0 %v1077
        %v1178 = vpop.f32.mrb[0].mxu0
        %v1179 = vadd.f32 %v1055, %v1178
        %v1180 = vpop.f32.mrb[0].mxu0
        %1181 = vmatprep.mubr.f32.mxu0 0.0
        %1182 = vmatmul.mubr.f32.gmra.mrb[0].mxu0 %v1080
        %v1183 = vpop.f32.mrb[0].mxu0
        %v1184 = vadd.f32 %v1055, %v1183
        %v1185 = vpop.f32.mrb[0].mxu0
        %1186 = vdwg.mxu0
        %v1187 = vmul.f32 %v1149, %v1149
        %v1188 = vmul.f32 %v1154, %v1154
        %v1189 = vmul.f32 %v1159, %v1159
        %v1190 = vmul.f32 %v1164, %v1164
        %v1191 = vmul.f32 %v1169, %v1169
        %v1192 = vmul.f32 %v1174, %v1174
        %v1193 = vmul.f32 %v1179, %v1179
        %v1194 = vmul.f32 %v1184, %v1184
        %v1195 = vld [vmem:[%s5] sm:$0xff]
        %v1196 = vld [vmem:[%s5 + $0x8] sm:$0xff]
        %v1197 = vld [vmem:[%s5 + $0x10] sm:$0xff]
        %v1198 = vld [vmem:[%s5 + $0x18] sm:$0xff]
        %v1200 = vsel %vm1057, %v1187, 0
        %v1203 = vsel %vm1057, %v1188, 0
        %v1206 = vsel %vm1057, %v1189, 0
        %v1209 = vsel %vm1057, %v1190, 0
        %v1212 = vsel %vm1057, %v1191, 0
        %v1215 = vsel %vm1057, %v1192, 0
        %v1218 = vsel %vm1057, %v1193, 0
        %v1221 = vsel %vm1057, %v1194, 0
        %1223 = vmatprep.subr.mxu0 0.0
        %1224 = vmatpush1.msra.mxu0 %v1195
        %1225 = vmatprep.subr.mxu0 0.0
        %1226 = vmatpush1.msra.mxu0 %v1196
        %1227 = vmatprep.subr.mxu0 0.0
        %1228 = vmatpush1.msra.mxu0 %v1197
        %1229 = vmatprep.subr.mxu0 0.0
        %1230 = vmatpush1.msra.mxu0 %v1198
        %1231 = vmatprep.subr.mxu0 0.0
        %1232 = vmatpush1.msra.mxu0 0.0
        %1233 = vmatprep.subr.mxu0 0.0
        %1234 = vmatpush1.msra.mxu0 0.0
        %1235 = vmatprep.subr.mxu0 0.0
        %1236 = vmatpush1.msra.mxu0 0.0
        %1237 = vmatprep.subr.mxu0 0.0
        %1238 = vmatpush1.msra.mxu0 0.0
        %1239 = vmatprep.subr.mxu0 0.0
        %1240 = vmatpush1.msra.mxu0 0.0
        %1241 = vmatprep.subr.mxu0 0.0
        %1242 = vmatpush1.msra.mxu0 0.0
        %1243 = vmatprep.subr.mxu0 0.0
        %1244 = vmatpush1.msra.mxu0 0.0
        %1245 = vmatprep.subr.mxu0 0.0
        %1246 = vmatpush1.msra.mxu0 0.0
        %1247 = vmatprep.subr.mxu0 0.0
        %1248 = vmatpush1.msra.mxu0 0.0
        %1249 = vmatprep.subr.mxu0 0.0
        %1250 = vmatpush1.msra.mxu0 0.0
        %1251 = vmatprep.subr.mxu0 0.0
        %1252 = vmatpush1.msra.mxu0 0.0
        %1253 = vmatprep.subr.mxu0 0.0
        %1254 = vmatpush1.msra.mxu0 0.0
        %1255 = vmatprep.subr.mxu0 0.0
        %1256 = vmatpush1.msra.mxu0 0.0
        %1257 = vmatprep.subr.mxu0 0.0
        %1258 = vmatpush1.msra.mxu0 0.0
        %1259 = vmatprep.subr.mxu0 0.0
        %1260 = vmatpush1.msra.mxu0 0.0
        %1261 = vmatprep.subr.mxu0 0.0
        %1262 = vmatpush1.msra.mxu0 0.0
        %1263 = vmatprep.subr.mxu0 0.0
        %1264 = vmatpush1.msra.mxu0 0.0
        %1265 = vmatprep.subr.mxu0 0.0
        %1266 = vmatpush1.msra.mxu0 0.0
        %1267 = vmatprep.subr.mxu0 0.0
        %1268 = vmatpush1.msra.mxu0 0.0
        %1269 = vmatprep.subr.mxu0 0.0
        %1270 = vmatpush1.msra.mxu0 0.0
        %1271 = vmatprep.subr.mxu0 0.0
        %1272 = vmatpush1.msra.mxu0 0.0
        %1273 = vmatprep.subr.mxu0 0.0
        %1274 = vmatpush1.msra.mxu0 0.0
        %1275 = vmatprep.subr.mxu0 0.0
        %1276 = vmatpush1.msra.mxu0 0.0
        %1277 = vmatprep.subr.mxu0 0.0
        %1278 = vmatpush1.msra.mxu0 0.0
        %1279 = vmatprep.subr.mxu0 0.0
        %1280 = vmatpush1.msra.mxu0 0.0
        %1281 = vmatprep.subr.mxu0 0.0
        %1282 = vmatpush1.msra.mxu0 0.0
        %1283 = vmatprep.subr.mxu0 0.0
        %1284 = vmatpush1.msra.mxu0 0.0
        %1285 = vmatprep.subr.mxu0 0.0
        %1286 = vmatpush1.msra.mxu0 0.0
        %1287 = vmatprep.mubr.f32.mxu0 0.0
        %1288 = vmatmul.mubr.f32.gmra.mrb[0].mxu0 %v1200
        %v1289 = vpop.f32.mrb[0].mxu0
        %v1290 = vadd.f32 0.0, %v1289
        %v1291 = vpop.f32.mrb[0].mxu0
        %1292 = vmatprep.mubr.f32.mxu0 0.0
        %1293 = vmatmul.mubr.f32.gmra.mrb[0].mxu0 %v1203
        %v1294 = vpop.f32.mrb[0].mxu0
        %v1295 = vadd.f32 0.0, %v1294
        %v1296 = vpop.f32.mrb[0].mxu0
        %1297 = vmatprep.mubr.f32.mxu0 0.0
        %1298 = vmatmul.mubr.f32.gmra.mrb[0].mxu0 %v1206
        %v1299 = vpop.f32.mrb[0].mxu0
        %v1300 = vadd.f32 0.0, %v1299
        %v1301 = vpop.f32.mrb[0].mxu0
        %1302 = vmatprep.mubr.f32.mxu0 0.0
        %1303 = vmatmul.mubr.f32.gmra.mrb[0].mxu0 %v1209
        %v1304 = vpop.f32.mrb[0].mxu0
        %v1305 = vadd.f32 0.0, %v1304
        %v1306 = vpop.f32.mrb[0].mxu0
        %1307 = vmatprep.mubr.f32.mxu0 0.0
        %1308 = vmatmul.mubr.f32.gmra.mrb[0].mxu0 %v1212
        %v1309 = vpop.f32.mrb[0].mxu0
        %v1310 = vadd.f32 0.0, %v1309
        %v1311 = vpop.f32.mrb[0].mxu0
        %1312 = vmatprep.mubr.f32.mxu0 0.0
        %1313 = vmatmul.mubr.f32.gmra.mrb[0].mxu0 %v1215
        %v1314 = vpop.f32.mrb[0].mxu0
        %v1315 = vadd.f32 0.0, %v1314
        %v1316 = vpop.f32.mrb[0].mxu0
        %1317 = vmatprep.mubr.f32.mxu0 0.0
        %1318 = vmatmul.mubr.f32.gmra.mrb[0].mxu0 %v1218
        %v1319 = vpop.f32.mrb[0].mxu0
        %v1320 = vadd.f32 0.0, %v1319
        %v1321 = vpop.f32.mrb[0].mxu0
        %1322 = vmatprep.mubr.f32.mxu0 0.0
        %1323 = vmatmul.mubr.f32.gmra.mrb[0].mxu0 %v1221
        %v1324 = vpop.f32.mrb[0].mxu0
        %v1325 = vadd.f32 0.0, %v1324
        %v1326 = vpop.f32.mrb[0].mxu0
        %1327 = vdwg.mxu0
        %v1328 = vmul.f32 %v1290, 0.17677669
        %v1329 = vmul.f32 %v1295, 0.17677669
        %v1330 = vmul.f32 %v1300, 0.17677669
        %v1331 = vmul.f32 %v1305, 0.17677669
        %v1332 = vmul.f32 %v1310, 0.17677669
        %v1333 = vmul.f32 %v1315, 0.17677669
        %v1334 = vmul.f32 %v1320, 0.17677669
        %v1335 = vmul.f32 %v1325, 0.17677669
        %v1336 = vlaneseq
        %v1337 = vand.u32 %v1336, 127
        %vm1338 = vcmp.ge.s32.totalorder %v1337, 0
        %vm1339 = vcmp.lt.s32.totalorder %v1337, 16
        %vm1340 = vmand %vm1338, %vm1339
        %1349 = vrot.lane.b32.xlu0 %v1149, 96
        %v1350 = vpop.permute.xlu0 %1349
        %1351 = vrot.lane.b32.xlu0 %v1154, 96
        %v1352 = vpop.permute.xlu0 %1351
        %1353 = vrot.lane.b32.xlu0 %v1159, 96
        %v1354 = vpop.permute.xlu0 %1353
        %1355 = vrot.lane.b32.xlu0 %v1164, 96
        %v1356 = vpop.permute.xlu0 %1355
        %1357 = vrot.lane.b32.xlu0 %v1169, 96
        %v1358 = vpop.permute.xlu0 %1357
        %1359 = vrot.lane.b32.xlu0 %v1174, 96
        %v1360 = vpop.permute.xlu0 %1359
        %1361 = vrot.lane.b32.xlu0 %v1179, 96
        %v1362 = vpop.permute.xlu0 %1361
        %1363 = vrot.lane.b32.xlu0 %v1184, 96
        %v1364 = vpop.permute.xlu0 %1363
        %v1373 = vsel %vm1340, %v1350, -inf
        %v1374 = vsel %vm1340, %v1352, -inf
        %v1375 = vsel %vm1340, %v1354, -inf
        %v1376 = vsel %vm1340, %v1356, -inf
        %v1377 = vsel %vm1340, %v1358, -inf
        %v1378 = vsel %vm1340, %v1360, -inf
        %v1379 = vsel %vm1340, %v1362, -inf
        %v1380 = vsel %vm1340, %v1364, -inf
        %vm1381 = vcmask 523264
        %v1382 = vsel %vm1381, %v1373, -inf
        %1383 = vmax.xlane.f32.xlu0 %v1382
        %v1384 = vpop.xlane.xlu0 %1383
        %v1385 = vsel %vm1381, %v1374, -inf
        %1386 = vmax.xlane.f32.xlu0 %v1385
        %v1387 = vpop.xlane.xlu0 %1386
        %v1388 = vsel %vm1381, %v1375, -inf
        %1389 = vmax.xlane.f32.xlu0 %v1388
        %v1390 = vpop.xlane.xlu0 %1389
        %v1391 = vsel %vm1381, %v1376, -inf
        %1392 = vmax.xlane.f32.xlu0 %v1391
        %v1393 = vpop.xlane.xlu0 %1392
        %v1394 = vsel %vm1381, %v1377, -inf
        %1395 = vmax.xlane.f32.xlu0 %v1394
        %v1396 = vpop.xlane.xlu0 %1395
        %v1397 = vsel %vm1381, %v1378, -inf
        %1398 = vmax.xlane.f32.xlu0 %v1397
        %v1399 = vpop.xlane.xlu0 %1398
        %v1400 = vsel %vm1381, %v1379, -inf
        %1401 = vmax.xlane.f32.xlu0 %v1400
        %v1402 = vpop.xlane.xlu0 %1401
        %v1403 = vsel %vm1381, %v1380, -inf
        %1404 = vmax.xlane.f32.xlu0 %v1403
        %v1405 = vpop.xlane.xlu0 %1404
        %v1406 = vsel %vm1340, %v1384, 0.0
        %v1407 = vsel %vm1340, %v1387, 0.0
        %v1408 = vsel %vm1340, %v1390, 0.0
        %v1409 = vsel %vm1340, %v1393, 0.0
        %v1410 = vsel %vm1340, %v1396, 0.0
        %v1411 = vsel %vm1340, %v1399, 0.0
        %v1412 = vsel %vm1340, %v1402, 0.0
        %v1413 = vsel %vm1340, %v1405, 0.0
        %vm1414 = vcmp.ge.s32.totalorder %v1337, 16
        %vm1415 = vcmp.lt.s32.totalorder %v1337, 32
        %vm1416 = vmand %vm1414, %vm1415
        %v1417 = vsel %vm1416, %v1350, -inf
        %v1418 = vsel %vm1416, %v1352, -inf
        %v1419 = vsel %vm1416, %v1354, -inf
        %v1420 = vsel %vm1416, %v1356, -inf
        %v1421 = vsel %vm1416, %v1358, -inf
        %v1422 = vsel %vm1416, %v1360, -inf
        %v1423 = vsel %vm1416, %v1362, -inf
        %v1424 = vsel %vm1416, %v1364, -inf
        %v1425 = vsel %vm1381, %v1417, -inf
        %1426 = vmax.xlane.f32.xlu0 %v1425
        %v1427 = vpop.xlane.xlu0 %1426
        %v1428 = vsel %vm1381, %v1418, -inf
        %1429 = vmax.xlane.f32.xlu0 %v1428
        %v1430 = vpop.xlane.xlu0 %1429
        %v1431 = vsel %vm1381, %v1419, -inf
        %1432 = vmax.xlane.f32.xlu0 %v1431
        %v1433 = vpop.xlane.xlu0 %1432
        %v1434 = vsel %vm1381, %v1420, -inf
        %1435 = vmax.xlane.f32.xlu0 %v1434
        %v1436 = vpop.xlane.xlu0 %1435
        %v1437 = vsel %vm1381, %v1421, -inf
        %1438 = vmax.xlane.f32.xlu0 %v1437
        %v1439 = vpop.xlane.xlu0 %1438
        %v1440 = vsel %vm1381, %v1422, -inf
        %1441 = vmax.xlane.f32.xlu0 %v1440
        %v1442 = vpop.xlane.xlu0 %1441
        %v1443 = vsel %vm1381, %v1423, -inf
        %1444 = vmax.xlane.f32.xlu0 %v1443
        %v1445 = vpop.xlane.xlu0 %1444
        %v1446 = vsel %vm1381, %v1424, -inf
        %1447 = vmax.xlane.f32.xlu0 %v1446
        %v1448 = vpop.xlane.xlu0 %1447
        %v1449 = vsel %vm1416, %v1427, %v1406
        %v1450 = vsel %vm1416, %v1430, %v1407
        %v1451 = vsel %vm1416, %v1433, %v1408
        %v1452 = vsel %vm1416, %v1436, %v1409
        %v1453 = vsel %vm1416, %v1439, %v1410
        %v1454 = vsel %vm1416, %v1442, %v1411
        %v1455 = vsel %vm1416, %v1445, %v1412
        %v1456 = vsel %vm1416, %v1448, %v1413
        %vm1457 = vcmp.ge.s32.totalorder %v1337, 32
        %vm1458 = vcmp.lt.s32.totalorder %v1337, 48
        %vm1459 = vmand %vm1457, %vm1458
        %v1460 = vsel %vm1459, %v1350, -inf
        %v1461 = vsel %vm1459, %v1352, -inf
        %v1462 = vsel %vm1459, %v1354, -inf
        %v1463 = vsel %vm1459, %v1356, -inf
        %v1464 = vsel %vm1459, %v1358, -inf
        %v1465 = vsel %vm1459, %v1360, -inf
        %v1466 = vsel %vm1459, %v1362, -inf
        %v1467 = vsel %vm1459, %v1364, -inf
        %v1468 = vsel %vm1381, %v1460, -inf
        %1469 = vmax.xlane.f32.xlu0 %v1468
        %v1470 = vpop.xlane.xlu0 %1469
        %v1471 = vsel %vm1381, %v1461, -inf
        %1472 = vmax.xlane.f32.xlu0 %v1471
        %v1473 = vpop.xlane.xlu0 %1472
        %v1474 = vsel %vm1381, %v1462, -inf
        %1475 = vmax.xlane.f32.xlu0 %v1474
        %v1476 = vpop.xlane.xlu0 %1475
        %v1477 = vsel %vm1381, %v1463, -inf
        %1478 = vmax.xlane.f32.xlu0 %v1477
        %v1479 = vpop.xlane.xlu0 %1478
        %v1480 = vsel %vm1381, %v1464, -inf
        %1481 = vmax.xlane.f32.xlu0 %v1480
        %v1482 = vpop.xlane.xlu0 %1481
        %v1483 = vsel %vm1381, %v1465, -inf
        %1484 = vmax.xlane.f32.xlu0 %v1483
        %v1485 = vpop.xlane.xlu0 %1484
        %v1486 = vsel %vm1381, %v1466, -inf
        %1487 = vmax.xlane.f32.xlu0 %v1486
        %v1488 = vpop.xlane.xlu0 %1487
        %v1489 = vsel %vm1381, %v1467, -inf
        %1490 = vmax.xlane.f32.xlu0 %v1489
        %v1491 = vpop.xlane.xlu0 %1490
        %v1492 = vsel %vm1459, %v1470, %v1449
        %v1493 = vsel %vm1459, %v1473, %v1450
        %v1494 = vsel %vm1459, %v1476, %v1451
        %v1495 = vsel %vm1459, %v1479, %v1452
        %v1496 = vsel %vm1459, %v1482, %v1453
        %v1497 = vsel %vm1459, %v1485, %v1454
        %v1498 = vsel %vm1459, %v1488, %v1455
        %v1499 = vsel %vm1459, %v1491, %v1456
        %vm1500 = vcmp.ge.s32.totalorder %v1337, 48
        %vm1501 = vcmp.lt.s32.totalorder %v1337, 64
        %vm1502 = vmand %vm1500, %vm1501
        %v1503 = vsel %vm1502, %v1350, -inf
        %v1504 = vsel %vm1502, %v1352, -inf
        %v1505 = vsel %vm1502, %v1354, -inf
        %v1506 = vsel %vm1502, %v1356, -inf
        %v1507 = vsel %vm1502, %v1358, -inf
        %v1508 = vsel %vm1502, %v1360, -inf
        %v1509 = vsel %vm1502, %v1362, -inf
        %v1510 = vsel %vm1502, %v1364, -inf
        %v1511 = vsel %vm1381, %v1503, -inf
        %1512 = vmax.xlane.f32.xlu0 %v1511
        %v1513 = vpop.xlane.xlu0 %1512
        %v1514 = vsel %vm1381, %v1504, -inf
        %1515 = vmax.xlane.f32.xlu0 %v1514
        %v1516 = vpop.xlane.xlu0 %1515
        %v1517 = vsel %vm1381, %v1505, -inf
        %1518 = vmax.xlane.f32.xlu0 %v1517
        %v1519 = vpop.xlane.xlu0 %1518
        %v1520 = vsel %vm1381, %v1506, -inf
        %1521 = vmax.xlane.f32.xlu0 %v1520
        %v1522 = vpop.xlane.xlu0 %1521
        %v1523 = vsel %vm1381, %v1507, -inf
        %1524 = vmax.xlane.f32.xlu0 %v1523
        %v1525 = vpop.xlane.xlu0 %1524
        %v1526 = vsel %vm1381, %v1508, -inf
        %1527 = vmax.xlane.f32.xlu0 %v1526
        %v1528 = vpop.xlane.xlu0 %1527
        %v1529 = vsel %vm1381, %v1509, -inf
        %1530 = vmax.xlane.f32.xlu0 %v1529
        %v1531 = vpop.xlane.xlu0 %1530
        %v1532 = vsel %vm1381, %v1510, -inf
        %1533 = vmax.xlane.f32.xlu0 %v1532
        %v1534 = vpop.xlane.xlu0 %1533
        %v1535 = vsel %vm1502, %v1513, %v1492
        %v1536 = vsel %vm1502, %v1516, %v1493
        %v1537 = vsel %vm1502, %v1519, %v1494
        %v1538 = vsel %vm1502, %v1522, %v1495
        %v1539 = vsel %vm1502, %v1525, %v1496
        %v1540 = vsel %vm1502, %v1528, %v1497
        %v1541 = vsel %vm1502, %v1531, %v1498
        %v1542 = vsel %vm1502, %v1534, %v1499
        %1551 = vrot.lane.b32.xlu0 %v1328, 32
        %v1552 = vpop.permute.xlu0 %1551
        %1553 = vrot.lane.b32.xlu0 %v1329, 32
        %v1554 = vpop.permute.xlu0 %1553
        %1555 = vrot.lane.b32.xlu0 %v1330, 32
        %v1556 = vpop.permute.xlu0 %1555
        %1557 = vrot.lane.b32.xlu0 %v1331, 32
        %v1558 = vpop.permute.xlu0 %1557
        %1559 = vrot.lane.b32.xlu0 %v1332, 32
        %v1560 = vpop.permute.xlu0 %1559
        %1561 = vrot.lane.b32.xlu0 %v1333, 32
        %v1562 = vpop.permute.xlu0 %1561
        %1563 = vrot.lane.b32.xlu0 %v1334, 32
        %v1564 = vpop.permute.xlu0 %1563
        %1565 = vrot.lane.b32.xlu0 %v1335, 32
        %v1566 = vpop.permute.xlu0 %1565
        %v1575 = vsub.f32 %v1149, %v1552
        %v1576 = vsub.f32 %v1154, %v1554
        %v1577 = vsub.f32 %v1159, %v1556
        %v1578 = vsub.f32 %v1164, %v1558
        %v1579 = vsub.f32 %v1169, %v1560
        %v1580 = vsub.f32 %v1174, %v1562
        %v1581 = vsub.f32 %v1179, %v1564
        %v1582 = vsub.f32 %v1184, %v1566
        %1591 = vrot.lane.b32.xlu0 %v1535, 32
        %v1592 = vpop.permute.xlu0 %1591
        %1593 = vrot.lane.b32.xlu0 %v1536, 32
        %v1594 = vpop.permute.xlu0 %1593
        %1595 = vrot.lane.b32.xlu0 %v1537, 32
        %v1596 = vpop.permute.xlu0 %1595
        %1597 = vrot.lane.b32.xlu0 %v1538, 32
        %v1598 = vpop.permute.xlu0 %1597
        %1599 = vrot.lane.b32.xlu0 %v1539, 32
        %v1600 = vpop.permute.xlu0 %1599
        %1601 = vrot.lane.b32.xlu0 %v1540, 32
        %v1602 = vpop.permute.xlu0 %1601
        %1603 = vrot.lane.b32.xlu0 %v1541, 32
        %v1604 = vpop.permute.xlu0 %1603
        %1605 = vrot.lane.b32.xlu0 %v1542, 32
        %v1606 = vpop.permute.xlu0 %1605
        %v1615 = vsub.f32 %v1575, %v1592
        %v1616 = vsub.f32 %v1576, %v1594
        %v1617 = vsub.f32 %v1577, %v1596
        %v1618 = vsub.f32 %v1578, %v1598
        %v1619 = vsub.f32 %v1579, %v1600
        %v1620 = vsub.f32 %v1580, %v1602
        %v1621 = vsub.f32 %v1581, %v1604
        %v1622 = vsub.f32 %v1582, %v1606
        %v1623 = vmul.f32 %v1615, 1.442695
        %v1624 = vpow.pop %v1623
        %v1625 = vmul.f32 %v1616, 1.442695
        %v1626 = vpow.pop %v1625
        %v1627 = vmul.f32 %v1617, 1.442695
        %v1628 = vpow.pop %v1627
        %v1629 = vmul.f32 %v1618, 1.442695
        %v1630 = vpow.pop %v1629
        %v1631 = vmul.f32 %v1619, 1.442695
        %v1632 = vpow.pop %v1631
        %v1633 = vmul.f32 %v1620, 1.442695
        %v1634 = vpow.pop %v1633
        %v1635 = vmul.f32 %v1621, 1.442695
        %v1636 = vpow.pop %v1635
        %v1637 = vmul.f32 %v1622, 1.442695
        %v1638 = vpow.pop %v1637
        %v1639 = vadd.f32 %v1624, 0.0001
        %v1640 = vadd.f32 %v1626, 0.0001
        %v1641 = vadd.f32 %v1628, 0.0001
        %v1642 = vadd.f32 %v1630, 0.0001
        %v1643 = vadd.f32 %v1632, 0.0001
        %v1644 = vadd.f32 %v1634, 0.0001
        %v1645 = vadd.f32 %v1636, 0.0001
        %v1646 = vadd.f32 %v1638, 0.0001
        %v1647 = vld [vmem:[#allocation2] sm:$0xff]
        %v1648 = vld [vmem:[#allocation2 + $0x8] sm:$0xff]
        %v1649 = vld [vmem:[#allocation2 + $0x10] sm:$0xff]
        %v1650 = vld [vmem:[#allocation2 + $0x18] sm:$0xff]
        %v1651 = vld [vmem:[#allocation2 + $0x20] sm:$0xff]
        %v1652 = vld [vmem:[#allocation2 + $0x28] sm:$0xff]
        %v1653 = vld [vmem:[#allocation2 + $0x30] sm:$0xff]
        %v1654 = vld [vmem:[#allocation2 + $0x38] sm:$0xff]
        %1663 = vrot.lane.b32.xlu0 %v1639, 96
        %v1664 = vpop.permute.xlu0 %1663
        %1665 = vrot.lane.b32.xlu0 %v1640, 96
        %v1666 = vpop.permute.xlu0 %1665
        %1667 = vrot.lane.b32.xlu0 %v1641, 96
        %v1668 = vpop.permute.xlu0 %1667
        %1669 = vrot.lane.b32.xlu0 %v1642, 96
        %v1670 = vpop.permute.xlu0 %1669
        %1671 = vrot.lane.b32.xlu0 %v1643, 96
        %v1672 = vpop.permute.xlu0 %1671
        %1673 = vrot.lane.b32.xlu0 %v1644, 96
        %v1674 = vpop.permute.xlu0 %1673
        %1675 = vrot.lane.b32.xlu0 %v1645, 96
        %v1676 = vpop.permute.xlu0 %1675
        %1677 = vrot.lane.b32.xlu0 %v1646, 96
        %v1678 = vpop.permute.xlu0 %1677
        %v1679 = vsel %vm1381, %v1664, 0
        %v1681 = vsel %vm1381, %v1666, 0
        %v1683 = vsel %vm1381, %v1668, 0
        %v1685 = vsel %vm1381, %v1670, 0
        %v1687 = vsel %vm1381, %v1672, 0
        %v1689 = vsel %vm1381, %v1674, 0
        %v1691 = vsel %vm1381, %v1676, 0
        %v1693 = vsel %vm1381, %v1678, 0
        %1695 = vmatprep.subr.mxu0 0.0
        %1696 = vmatpush1.msra.mxu0 %v1647
        %1697 = vmatprep.subr.mxu0 0.0
        %1698 = vmatpush1.msra.mxu0 %v1648
        %1699 = vmatprep.subr.mxu0 0.0
        %1700 = vmatpush1.msra.mxu0 %v1649
        %1701 = vmatprep.subr.mxu0 0.0
        %1702 = vmatpush1.msra.mxu0 %v1650
        %1703 = vmatprep.subr.mxu0 0.0
        %1704 = vmatpush1.msra.mxu0 %v1651
        %1705 = vmatprep.subr.mxu0 0.0
        %1706 = vmatpush1.msra.mxu0 %v1652
        %1707 = vmatprep.subr.mxu0 0.0
        %1708 = vmatpush1.msra.mxu0 %v1653
        %1709 = vmatprep.subr.mxu0 0.0
        %1710 = vmatpush1.msra.mxu0 %v1654
        %1711 = vmatprep.subr.mxu0 0.0
        %1712 = vmatpush1.msra.mxu0 0.0
        %1713 = vmatprep.subr.mxu0 0.0
        %1714 = vmatpush1.msra.mxu0 0.0
        %1715 = vmatprep.subr.mxu0 0.0
        %1716 = vmatpush1.msra.mxu0 0.0
        %1717 = vmatprep.subr.mxu0 0.0
        %1718 = vmatpush1.msra.mxu0 0.0
        %1719 = vmatprep.subr.mxu0 0.0
        %1720 = vmatpush1.msra.mxu0 0.0
        %1721 = vmatprep.subr.mxu0 0.0
        %1722 = vmatpush1.msra.mxu0 0.0
        %1723 = vmatprep.subr.mxu0 0.0
        %1724 = vmatpush1.msra.mxu0 0.0
        %1725 = vmatprep.subr.mxu0 0.0
        %1726 = vmatpush1.msra.mxu0 0.0
        %1727 = vmatprep.subr.mxu0 0.0
        %1728 = vmatpush1.msra.mxu0 0.0
        %1729 = vmatprep.subr.mxu0 0.0
        %1730 = vmatpush1.msra.mxu0 0.0
        %1731 = vmatprep.subr.mxu0 0.0
        %1732 = vmatpush1.msra.mxu0 0.0
        %1733 = vmatprep.subr.mxu0 0.0
        %1734 = vmatpush1.msra.mxu0 0.0
        %1735 = vmatprep.subr.mxu0 0.0
        %1736 = vmatpush1.msra.mxu0 0.0
        %1737 = vmatprep.subr.mxu0 0.0
        %1738 = vmatpush1.msra.mxu0 0.0
        %1739 = vmatprep.subr.mxu0 0.0
        %1740 = vmatpush1.msra.mxu0 0.0
        %1741 = vmatprep.subr.mxu0 0.0
        %1742 = vmatpush1.msra.mxu0 0.0
        %1743 = vmatprep.subr.mxu0 0.0
        %1744 = vmatpush1.msra.mxu0 0.0
        %1745 = vmatprep.subr.mxu0 0.0
        %1746 = vmatpush1.msra.mxu0 0.0
        %1747 = vmatprep.subr.mxu0 0.0
        %1748 = vmatpush1.msra.mxu0 0.0
        %1749 = vmatprep.subr.mxu0 0.0
        %1750 = vmatpush1.msra.mxu0 0.0
        %1751 = vmatprep.subr.mxu0 0.0
        %1752 = vmatpush1.msra.mxu0 0.0
        %1753 = vmatprep.subr.mxu0 0.0
        %1754 = vmatpush1.msra.mxu0 0.0
        %1755 = vmatprep.subr.mxu0 0.0
        %1756 = vmatpush1.msra.mxu0 0.0
        %1757 = vmatprep.subr.mxu0 0.0
        %1758 = vmatpush1.msra.mxu0 0.0
        %1759 = vmatprep.mubr.f32.mxu0 0.0
        %1760 = vmatmul.mubr.f32.gmra.mrb[0].mxu0 %v1679
        %v1761 = vpop.f32.mrb[0].mxu0
        %v1762 = vadd.f32 0.0, %v1761
        %v1763 = vpop.f32.mrb[0].mxu0
        %1764 = vmatprep.mubr.f32.mxu0 0.0
        %1765 = vmatmul.mubr.f32.gmra.mrb[0].mxu0 %v1681
        %v1766 = vpop.f32.mrb[0].mxu0
        %v1767 = vadd.f32 0.0, %v1766
        %v1768 = vpop.f32.mrb[0].mxu0
        %1769 = vmatprep.mubr.f32.mxu0 0.0
        %1770 = vmatmul.mubr.f32.gmra.mrb[0].mxu0 %v1683
        %v1771 = vpop.f32.mrb[0].mxu0
        %v1772 = vadd.f32 0.0, %v1771
        %v1773 = vpop.f32.mrb[0].mxu0
        %1774 = vmatprep.mubr.f32.mxu0 0.0
        %1775 = vmatmul.mubr.f32.gmra.mrb[0].mxu0 %v1685
        %v1776 = vpop.f32.mrb[0].mxu0
        %v1777 = vadd.f32 0.0, %v1776
        %v1778 = vpop.f32.mrb[0].mxu0
        %1779 = vmatprep.mubr.f32.mxu0 0.0
        %1780 = vmatmul.mubr.f32.gmra.mrb[0].mxu0 %v1687
        %v1781 = vpop.f32.mrb[0].mxu0
        %v1782 = vadd.f32 0.0, %v1781
        %v1783 = vpop.f32.mrb[0].mxu0
        %1784 = vmatprep.mubr.f32.mxu0 0.0
        %1785 = vmatmul.mubr.f32.gmra.mrb[0].mxu0 %v1689
        %v1786 = vpop.f32.mrb[0].mxu0
        %v1787 = vadd.f32 0.0, %v1786
        %v1788 = vpop.f32.mrb[0].mxu0
        %1789 = vmatprep.mubr.f32.mxu0 0.0
        %1790 = vmatmul.mubr.f32.gmra.mrb[0].mxu0 %v1691
        %v1791 = vpop.f32.mrb[0].mxu0
        %v1792 = vadd.f32 0.0, %v1791
        %v1793 = vpop.f32.mrb[0].mxu0
        %1794 = vmatprep.mubr.f32.mxu0 0.0
        %1795 = vmatmul.mubr.f32.gmra.mrb[0].mxu0 %v1693
        %v1796 = vpop.f32.mrb[0].mxu0
        %v1797 = vadd.f32 0.0, %v1796
        %v1798 = vpop.f32.mrb[0].mxu0
        %1799 = vdwg.mxu0
        %v1800 = vld [vmem:[#allocation3] sm:$0x1]
        %v1802 = vlaneseq
        %v1803 = vshrl.u32 %v1802, 7
        %v1804 = vsub.s32 0, %v1803
        %v1805 = vrot.slane %v1800, %v1804
        %1806 = vrot.lane.b32.xlu0 %v1805, 32
        %v1807 = vpop.permute.xlu0 %1806
        %v1809 = vmul.f32 %v1639, %v1807
        %v1810 = vmul.f32 %v1640, %v1807
        %v1811 = vmul.f32 %v1641, %v1807
        %v1812 = vmul.f32 %v1642, %v1807
        %v1813 = vmul.f32 %v1643, %v1807
        %v1814 = vmul.f32 %v1644, %v1807
        %v1815 = vmul.f32 %v1645, %v1807
        %v1816 = vmul.f32 %v1646, %v1807
        %v1817 = vld [vmem:[%s6] sm:$0xff]
        %v1818 = vld [vmem:[%s6 + $0x8] sm:$0xff]
        %v1819 = vld [vmem:[%s6 + $0x10] sm:$0xff]
        %v1820 = vld [vmem:[%s6 + $0x18] sm:$0xff]
        %v1821 = vld [vmem:[%s6 + $0x20] sm:$0xff]
        %v1822 = vld [vmem:[%s6 + $0x28] sm:$0xff]
        %v1823 = vld [vmem:[%s6 + $0x30] sm:$0xff]
        %v1824 = vld [vmem:[%s6 + $0x38] sm:$0xff]
        %1833 = vrot.lane.b32.xlu0 %v1809, 96
        %v1834 = vpop.permute.xlu0 %1833
        %1835 = vrot.lane.b32.xlu0 %v1810, 96
        %v1836 = vpop.permute.xlu0 %1835
        %1837 = vrot.lane.b32.xlu0 %v1811, 96
        %v1838 = vpop.permute.xlu0 %1837
        %1839 = vrot.lane.b32.xlu0 %v1812, 96
        %v1840 = vpop.permute.xlu0 %1839
        %1841 = vrot.lane.b32.xlu0 %v1813, 96
        %v1842 = vpop.permute.xlu0 %1841
        %1843 = vrot.lane.b32.xlu0 %v1814, 96
        %v1844 = vpop.permute.xlu0 %1843
        %1845 = vrot.lane.b32.xlu0 %v1815, 96
        %v1846 = vpop.permute.xlu0 %1845
        %1847 = vrot.lane.b32.xlu0 %v1816, 96
        %v1848 = vpop.permute.xlu0 %1847
        %v1849 = vsel %vm1381, %v1834, 0
        %v1851 = vsel %vm1381, %v1836, 0
        %v1853 = vsel %vm1381, %v1838, 0
        %v1855 = vsel %vm1381, %v1840, 0
        %v1857 = vsel %vm1381, %v1842, 0
        %v1859 = vsel %vm1381, %v1844, 0
        %v1861 = vsel %vm1381, %v1846, 0
        %v1863 = vsel %vm1381, %v1848, 0
        %1865 = vmatprep.subr.mxu0 0.0
        %1866 = vmatpush1.msra.mxu0 %v1817
        %1867 = vmatprep.subr.mxu0 0.0
        %1868 = vmatpush1.msra.mxu0 %v1818
        %1869 = vmatprep.subr.mxu0 0.0
        %1870 = vmatpush1.msra.mxu0 %v1819
        %1871 = vmatprep.subr.mxu0 0.0
        %1872 = vmatpush1.msra.mxu0 %v1820
        %1873 = vmatprep.subr.mxu0 0.0
        %1874 = vmatpush1.msra.mxu0 %v1821
        %1875 = vmatprep.subr.mxu0 0.0
        %1876 = vmatpush1.msra.mxu0 %v1822
        %1877 = vmatprep.subr.mxu0 0.0
        %1878 = vmatpush1.msra.mxu0 %v1823
        %1879 = vmatprep.subr.mxu0 0.0
        %1880 = vmatpush1.msra.mxu0 %v1824
        %1881 = vmatprep.subr.mxu0 0.0
        %1882 = vmatpush1.msra.mxu0 0.0
        %1883 = vmatprep.subr.mxu0 0.0
        %1884 = vmatpush1.msra.mxu0 0.0
        %1885 = vmatprep.subr.mxu0 0.0
        %1886 = vmatpush1.msra.mxu0 0.0
        %1887 = vmatprep.subr.mxu0 0.0
        %1888 = vmatpush1.msra.mxu0 0.0
        %1889 = vmatprep.subr.mxu0 0.0
        %1890 = vmatpush1.msra.mxu0 0.0
        %1891 = vmatprep.subr.mxu0 0.0
        %1892 = vmatpush1.msra.mxu0 0.0
        %1893 = vmatprep.subr.mxu0 0.0
        %1894 = vmatpush1.msra.mxu0 0.0
        %1895 = vmatprep.subr.mxu0 0.0
        %1896 = vmatpush1.msra.mxu0 0.0
        %1897 = vmatprep.subr.mxu0 0.0
        %1898 = vmatpush1.msra.mxu0 0.0
        %1899 = vmatprep.subr.mxu0 0.0
        %1900 = vmatpush1.msra.mxu0 0.0
        %1901 = vmatprep.subr.mxu0 0.0
        %1902 = vmatpush1.msra.mxu0 0.0
        %1903 = vmatprep.subr.mxu0 0.0
        %1904 = vmatpush1.msra.mxu0 0.0
        %1905 = vmatprep.subr.mxu0 0.0
        %1906 = vmatpush1.msra.mxu0 0.0
        %1907 = vmatprep.subr.mxu0 0.0
        %1908 = vmatpush1.msra.mxu0 0.0
        %1909 = vmatprep.subr.mxu0 0.0
        %1910 = vmatpush1.msra.mxu0 0.0
        %1911 = vmatprep.subr.mxu0 0.0
        %1912 = vmatpush1.msra.mxu0 0.0
        %1913 = vmatprep.subr.mxu0 0.0
        %1914 = vmatpush1.msra.mxu0 0.0
        %1915 = vmatprep.subr.mxu0 0.0
        %1916 = vmatpush1.msra.mxu0 0.0
        %1917 = vmatprep.subr.mxu0 0.0
        %1918 = vmatpush1.msra.mxu0 0.0
        %1919 = vmatprep.subr.mxu0 0.0
        %1920 = vmatpush1.msra.mxu0 0.0
        %1921 = vmatprep.subr.mxu0 0.0
        %1922 = vmatpush1.msra.mxu0 0.0
        %1923 = vmatprep.subr.mxu0 0.0
        %1924 = vmatpush1.msra.mxu0 0.0
        %1925 = vmatprep.subr.mxu0 0.0
        %1926 = vmatpush1.msra.mxu0 0.0
        %1927 = vmatprep.subr.mxu0 0.0
        %1928 = vmatpush1.msra.mxu0 0.0
        %1929 = vmatprep.mubr.f32.mxu0 0.0
        %1930 = vmatmul.mubr.f32.gmra.mrb[0].mxu0 %v1849
        %v1931 = vpop.f32.mrb[0].mxu0
        %v1932 = vadd.f32 0.0, %v1931
        %v1933 = vpop.f32.mrb[0].mxu0
        %1934 = vmatprep.mubr.f32.mxu0 0.0
        %1935 = vmatmul.mubr.f32.gmra.mrb[0].mxu0 %v1851
        %v1936 = vpop.f32.mrb[0].mxu0
        %v1937 = vadd.f32 0.0, %v1936
        %v1938 = vpop.f32.mrb[0].mxu0
        %1939 = vmatprep.mubr.f32.mxu0 0.0
        %1940 = vmatmul.mubr.f32.gmra.mrb[0].mxu0 %v1853
        %v1941 = vpop.f32.mrb[0].mxu0
        %v1942 = vadd.f32 0.0, %v1941
        %v1943 = vpop.f32.mrb[0].mxu0
        %1944 = vmatprep.mubr.f32.mxu0 0.0
        %1945 = vmatmul.mubr.f32.gmra.mrb[0].mxu0 %v1855
        %v1946 = vpop.f32.mrb[0].mxu0
        %v1947 = vadd.f32 0.0, %v1946
        %v1948 = vpop.f32.mrb[0].mxu0
        %1949 = vmatprep.mubr.f32.mxu0 0.0
        %1950 = vmatmul.mubr.f32.gmra.mrb[0].mxu0 %v1857
        %v1951 = vpop.f32.mrb[0].mxu0
        %v1952 = vadd.f32 0.0, %v1951
        %v1953 = vpop.f32.mrb[0].mxu0
        %1954 = vmatprep.mubr.f32.mxu0 0.0
        %1955 = vmatmul.mubr.f32.gmra.mrb[0].mxu0 %v1859
        %v1956 = vpop.f32.mrb[0].mxu0
        %v1957 = vadd.f32 0.0, %v1956
        %v1958 = vpop.f32.mrb[0].mxu0
        %1959 = vmatprep.mubr.f32.mxu0 0.0
        %1960 = vmatmul.mubr.f32.gmra.mrb[0].mxu0 %v1861
        %v1961 = vpop.f32.mrb[0].mxu0
        %v1962 = vadd.f32 0.0, %v1961
        %v1963 = vpop.f32.mrb[0].mxu0
        %1964 = vmatprep.mubr.f32.mxu0 0.0
        %1965 = vmatmul.mubr.f32.gmra.mrb[0].mxu0 %v1863
        %v1966 = vpop.f32.mrb[0].mxu0
        %v1967 = vadd.f32 0.0, %v1966
        %v1968 = vpop.f32.mrb[0].mxu0
        %1969 = vdwg.mxu0
        %v1970 = vrcp.pop %v1932
        %v1971 = vrcp.pop %v1937
        %v1972 = vrcp.pop %v1942
        %v1973 = vrcp.pop %v1947
        %v1974 = vrcp.pop %v1952
        %v1975 = vrcp.pop %v1957
        %v1976 = vrcp.pop %v1962
        %v1977 = vrcp.pop %v1967
        %v1978 = vmul.f32 %v1932, %v1970
        %v1979 = vmul.f32 %v1937, %v1971
        %v1980 = vmul.f32 %v1942, %v1972
        %v1981 = vmul.f32 %v1947, %v1973
        %v1982 = vmul.f32 %v1952, %v1974
        %v1983 = vmul.f32 %v1957, %v1975
        %v1984 = vmul.f32 %v1962, %v1976
        %v1985 = vmul.f32 %v1967, %v1977
        %v1986 = vsub.f32 2.0, %v1978
        %v1987 = vsub.f32 2.0, %v1979
        %v1988 = vsub.f32 2.0, %v1980
        %v1989 = vsub.f32 2.0, %v1981
        %v1990 = vsub.f32 2.0, %v1982
        %v1991 = vsub.f32 2.0, %v1983
        %v1992 = vsub.f32 2.0, %v1984
        %v1993 = vsub.f32 2.0, %v1985
        %v1994 = vmul.f32 %v1970, %v1986
        %v1995 = vmul.f32 %v1971, %v1987
        %v1996 = vmul.f32 %v1972, %v1988
        %v1997 = vmul.f32 %v1973, %v1989
        %v1998 = vmul.f32 %v1974, %v1990
        %v1999 = vmul.f32 %v1975, %v1991
        %v2000 = vmul.f32 %v1976, %v1992
        %v2001 = vmul.f32 %v1977, %v1993
        %v2002 = vmul.f32 %v1762, %v1994
        %v2003 = vmul.f32 %v1767, %v1995
        %v2004 = vmul.f32 %v1772, %v1996
        %v2005 = vmul.f32 %v1777, %v1997
        %v2006 = vmul.f32 %v1782, %v1998
        %v2007 = vmul.f32 %v1787, %v1999
        %v2008 = vmul.f32 %v1792, %v2000
        %v2009 = vmul.f32 %v1797, %v2001
        %2010 = vst.msk [vmem:[%s296] sm:$0xff] %vm1057, %v2002
        %2011 = vst.msk [vmem:[%s296 + $0x8] sm:$0xff] %vm1057, %v2003
        %2012 = vst.msk [vmem:[%s296 + $0x10] sm:$0xff] %vm1057, %v2004
        %2013 = vst.msk [vmem:[%s296 + $0x18] sm:$0xff] %vm1057, %v2005
        %2014 = vst.msk [vmem:[%s296 + $0x20] sm:$0xff] %vm1057, %v2006
        %2015 = vst.msk [vmem:[%s296 + $0x28] sm:$0xff] %vm1057, %v2007
        %2016 = vst.msk [vmem:[%s296 + $0x30] sm:$0xff] %vm1057, %v2008
        %2017 = vst.msk [vmem:[%s296 + $0x38] sm:$0xff] %vm1057, %v2009
      $region64: #{tpu_custom_call.1} parent=47 // pred_fallthru
        _
      %s2018 = smul.u32 %s22, %s23
      %s2019 = smul.u32 8, %s2018
      %p2020 = scmp.lt.s32.totalorder %s2019, 7
      %s2021 = scalar_select %p2020, %s2019, 7
      %s2022 = smul.addr %s2021, 8
      %s2023 = scalar_lea.vmem %s7, %s2022
      // Predicated region
      $region65: #{tpu_custom_call.1} parent=47 // pred_check
        %p2024 = pneg %p202
      $region66: #{tpu_custom_call.1} parent=47 // pred_check_branch
        %2026 = sbr.rel (%p2024) target = $region68
      $region67: #{tpu_custom_call.1} parent=47 // pred_region
        %s2027 = smul.u32 %s22, %s23
        %s2028 = smul.u32 8, %s2027
      $region68: #{tpu_custom_call.1} parent=47 // pred_fallthru
        _
    $region48: #{tpu_custom_call.1} parent=5 // pred_fallthru
      _
    %p2029 = scmp.le.s32.totalorder 2, %s13
    // Predicated region
    $region69: #{tpu_custom_call.1} parent=5 // pred_check
      %p2030 = pneg %p2029
    $region70: #{tpu_custom_call.1} parent=5 // pred_check_branch
      %2032 = sbr.rel (%p2030) target = $region72
    $region71: #{tpu_custom_call.1} parent=5 // pred_region
      %s2033 = ssub.s32 %s13, 2
      // Predicated region
      $region73: #{tpu_custom_call.1} parent=71 // pred_check
        %p2034 = pneg %p208
      $region74: #{tpu_custom_call.1} parent=71 // pred_check_branch
        %2036 = sbr.rel (%p2034) target = $region76
      $region75: #{tpu_custom_call.1} parent=71 // pred_region
        %s2037 = smul.u32 %s24, %s25
        %s2038 = smul.u32 8, %s2037
        %p2039 = scmp.lt.s32.totalorder %s2038, 7
        %s2040 = scalar_select %p2039, %s2038, 7
        %s2041 = smul.addr %s2040, 8
        %s2042 = scalar_lea.vmem %s7, %s2041
      $region76: #{tpu_custom_call.1} parent=71 // pred_fallthru
        _
    $region72: #{tpu_custom_call.1} parent=5 // pred_fallthru
      _
  $region6: #{tpu_custom_call.1} parent=0 // loop_footer
    %s17 = sadd.s32 1, %s13
  $region7: #{tpu_custom_call.1} parent=0 // loop_footer_branch
    %12 = sbr.rel target = $region3
  $region8: #{tpu_custom_call.1} parent=0 // loop_exit
    _

</llo_original>
